<compile_context>
chip_gen: v7x
topology: tpu7x:2x2x1
jax: 0.10.0
libtpu: 0.0.40
codegen_flags: <defaults>
</compile_context>

<pallas_src>
import math
import functools

import jax
import jax.numpy as jnp
from jax import lax
from jax.experimental import pallas as pl
from jax.experimental.pallas import tpu as pltpu


def _sab_kernel(x_ref, wqkv_ref, bqkv_ref, wo_ref, bo_ref, g1_ref, be1_ref,
                w1_ref, b1_ref, w2_ref, b2_ref, g2_ref, be2_ref,
                o_ref, attn_ref, *, num_heads, eps):
    L, N, E = x_ref.shape
    dh = E // num_heads

    # Hoist all weight loads out of the (unrolled) batch loop.
    wqkv = wqkv_ref[...]          # (E, 3E)   — scale already folded into Q part
    bqkv = bqkv_ref[...]          # (1, 3E)
    wo, bo = wo_ref[...], bo_ref[...]
    g1, be1 = g1_ref[...], be1_ref[...]
    w1, b1 = w1_ref[...], b1_ref[...]
    w2, b2 = w2_ref[...], b2_ref[...]
    g2, be2 = g2_ref[...], be2_ref[...]

    for n in range(N):
        x_n = x_ref[:, n, :].astype(jnp.float32)          # (L, E)

        # --- fused Q/K/V in-projection: one MXU push, 3E-wide output ---
        qkv = jnp.dot(x_n, wqkv, preferred_element_type=jnp.float32) + bqkv

        # --- per-head scaled dot-product attention (scale pre-folded) ---
        for h in range(num_heads):
            q_h = qkv[:, h * dh:(h + 1) * dh]             # (L, dh)
            k_h = qkv[:, E + h * dh:E + (h + 1) * dh]
            v_h = qkv[:, 2 * E + h * dh:2 * E + (h + 1) * dh]
            # q @ k^T without materializing a transpose: contract over dh.
            s = lax.dot_general(q_h, k_h, (((1,), (1,)), ((), ())),
                                preferred_element_type=jnp.float32)   # (L, L)
            s = s - jnp.max(s, axis=-1, keepdims=True)
            p = jnp.exp(s)
            p = p * pl.reciprocal(jnp.sum(p, axis=-1, keepdims=True),
                                  approx=True)
            # Write the head output directly into its scratch slice
            # (no jnp.concatenate).
            attn_ref[:, h * dh:(h + 1) * dh] = jnp.dot(
                p, v_h, preferred_element_type=jnp.float32)

        attn = attn_ref[...]                              # (L, E)

        # --- out projection + residual ---
        y = jnp.dot(attn, wo, preferred_element_type=jnp.float32) + bo + x_n

        # --- InstanceNorm1d #1: normalize over seq axis per (batch, channel) ---
        mu = jnp.mean(y, axis=0, keepdims=True)
        var = jnp.mean(jnp.square(y - mu), axis=0, keepdims=True)
        y = (y - mu) * lax.rsqrt(var + eps) * g1 + be1

        # --- feed-forward (Linear -> ReLU -> Linear) + residual ---
        h1 = jnp.dot(y, w1, preferred_element_type=jnp.float32) + b1
        h1 = jnp.maximum(h1, 0.0)
        z = jnp.dot(h1, w2, preferred_element_type=jnp.float32) + b2 + y

        # --- InstanceNorm1d #2 ---
        mu2 = jnp.mean(z, axis=0, keepdims=True)
        var2 = jnp.mean(jnp.square(z - mu2), axis=0, keepdims=True)
        z = (z - mu2) * lax.rsqrt(var2 + eps) * g2 + be2

        o_ref[:, n, :] = z.astype(o_ref.dtype)


def prepare_params(p, *, num_heads):
    """One-time parameter prep: fuse Q/K/V weights and fold in the 1/sqrt(dh) scale."""
    E = p["wq"].shape[0]
    scale = 1.0 / math.sqrt(E // num_heads)
    return {
        "wqkv": jnp.concatenate([p["wq"] * scale, p["wk"], p["wv"]], axis=1),
        "bqkv": jnp.concatenate([p["bq"] * scale, p["bk"], p["bv"]], axis=1),
        "wo": p["wo"], "bo": p["bo"],
        "g1": p["g1"], "be1": p["be1"],
        "w1": p["w1"], "b1": p["bf1"],
        "w2": p["w2"], "b2": p["bf2"],
        "g2": p["g2"], "be2": p["be2"],
    }


def self_attention_block(x_lne, fp, *, num_heads, eps=1e-5):
    """x_lne: (L, N, E) float32 -> (L, N, E) float32.  `fp` from prepare_params()."""
    L, N, E = x_lne.shape
    vmem = pl.BlockSpec(memory_space=pltpu.MemorySpace.VMEM)   # whole array in VMEM

    return pl.pallas_call(
        functools.partial(_sab_kernel, num_heads=num_heads, eps=eps),
        out_shape=jax.ShapeDtypeStruct((L, N, E), x_lne.dtype),
        in_specs=[vmem] * 13,
        out_specs=vmem,
        scratch_shapes=[pltpu.VMEM((L, E), jnp.float32)],      # per-batch attn output
        compiler_params=pltpu.CompilerParams(vmem_limit_bytes=32 * 1024 * 1024),
    )(x_lne,
      fp["wqkv"], fp["bqkv"], fp["wo"], fp["bo"],
      fp["g1"], fp["be1"],
      fp["w1"], fp["b1"], fp["w2"], fp["b2"],
      fp["g2"], fp["be2"])


def ref_forward(x_lne, p, num_heads, eps=1e-5):
    """Pure-JAX reference of the same forward pass (for validation)."""
    L, N, E = x_lne.shape
    dh = E // num_heads
    x = jnp.transpose(x_lne, (1, 0, 2))                     # (N, L, E)
    q = x @ p["wq"] + p["bq"]
    k = x @ p["wk"] + p["bk"]
    v = x @ p["wv"] + p["bv"]
    qh = q.reshape(N, L, num_heads, dh).transpose(0, 2, 1, 3) / math.sqrt(dh)
    kh = k.reshape(N, L, num_heads, dh).transpose(0, 2, 1, 3)
    vh = v.reshape(N, L, num_heads, dh).transpose(0, 2, 1, 3)
    s = jnp.einsum("nhqd,nhkd->nhqk", qh, kh)
    pr = jax.nn.softmax(s, axis=-1)
    o = jnp.einsum("nhqk,nhkd->nhqd", pr, vh).transpose(0, 2, 1, 3).reshape(N, L, E)
    o = o @ p["wo"] + p["bo"]
    y = o + x
    mu = y.mean(axis=1, keepdims=True)
    var = ((y - mu) ** 2).mean(axis=1, keepdims=True)
    y = (y - mu) / jnp.sqrt(var + eps) * p["g1"] + p["be1"]
    h = jnp.maximum(y @ p["w1"] + p["bf1"], 0.0)
    z = h @ p["w2"] + p["bf2"] + y
    mu2 = z.mean(axis=1, keepdims=True)
    var2 = ((z - mu2) ** 2).mean(axis=1, keepdims=True)
    z = (z - mu2) / jnp.sqrt(var2 + eps) * p["g2"] + p["be2"]
    return jnp.transpose(z, (1, 0, 2))


if __name__ == "__main__":
    # embed_dim=32, intermediate_dim=64, num_heads=4, normalization='inst'
    L, N, E, H, I = 8, 2, 32, 4, 64
    ks = jax.random.split(jax.random.PRNGKey(0), 13)
    s = 0.1
    raw = {
        # attention in-projection (pre-transposed to (in, out))
        "wq": jax.random.normal(ks[0], (E, E), jnp.float32) * s,
        "wk": jax.random.normal(ks[1], (E, E), jnp.float32) * s,
        "wv": jax.random.normal(ks[2], (E, E), jnp.float32) * s,
        "bq": jax.random.normal(ks[3], (1, E), jnp.float32) * s,
        "bk": jax.random.normal(ks[4], (1, E), jnp.float32) * s,
        "bv": jax.random.normal(ks[5], (1, E), jnp.float32) * s,
        # attention out-projection
        "wo": jax.random.normal(ks[6], (E, E), jnp.float32) * s,
        "bo": jax.random.normal(ks[7], (1, E), jnp.float32) * s,
        # InstanceNorm1d affine params (PyTorch default init: weight=1, bias=0)
        "g1": jnp.ones((1, E), jnp.float32),
        "be1": jnp.zeros((1, E), jnp.float32),
        "g2": jnp.ones((1, E), jnp.float32),
        "be2": jnp.zeros((1, E), jnp.float32),
        # feed-forward
        "w1": jax.random.normal(ks[8], (E, I), jnp.float32) * s,
        "bf1": jax.random.normal(ks[9], (1, I), jnp.float32) * s,
        "w2": jax.random.normal(ks[10], (I, E), jnp.float32) * s,
        "bf2": jax.random.normal(ks[11], (1, E), jnp.float32) * s,
    }
    x = jax.random.normal(ks[12], (L, N, E), jnp.float32)

    fused = prepare_params(raw, num_heads=H)
    out = self_attention_block(x, fused, num_heads=H)
    out = jax.block_until_ready(out)

    ref = ref_forward(x, raw, H)
    assert out.shape == (L, N, E), out.shape
    max_err = float(jnp.max(jnp.abs(out - ref)))
    assert max_err < 5e-3, max_err   # approx-reciprocal softmax, f32 elsewhere

    print("KERNEL_OK")
</pallas_src>

<mosaic_0001>
module attributes {stable_mosaic.version = 11 : i64} {
  func.func @_sab_kernel(%arg0: memref<8x2x32xf32, #tpu.memory_space<vmem>>, %arg1: memref<32x96xf32, #tpu.memory_space<vmem>>, %arg2: memref<1x96xf32, #tpu.memory_space<vmem>>, %arg3: memref<32x32xf32, #tpu.memory_space<vmem>>, %arg4: memref<1x32xf32, #tpu.memory_space<vmem>>, %arg5: memref<1x32xf32, #tpu.memory_space<vmem>>, %arg6: memref<1x32xf32, #tpu.memory_space<vmem>>, %arg7: memref<32x64xf32, #tpu.memory_space<vmem>>, %arg8: memref<1x64xf32, #tpu.memory_space<vmem>>, %arg9: memref<64x32xf32, #tpu.memory_space<vmem>>, %arg10: memref<1x32xf32, #tpu.memory_space<vmem>>, %arg11: memref<1x32xf32, #tpu.memory_space<vmem>>, %arg12: memref<1x32xf32, #tpu.memory_space<vmem>>, %arg13: memref<8x2x32xf32, #tpu.memory_space<vmem>>, %arg14: memref<8x32xf32, #tpu.memory_space<vmem>>) attributes {dimension_semantics = [], scalar_prefetch = 0 : i64, scratch_operands = 1 : i64, tpu.core_type = #tpu.core_type<tc>} {
    %c0 = arith.constant 0 : index
    %c0_0 = arith.constant 0 : index
    %0 = vector.load %arg1[%c0, %c0_0] : memref<32x96xf32, #tpu.memory_space<vmem>>, vector<32x96xf32>
    %c0_1 = arith.constant 0 : index
    %c0_2 = arith.constant 0 : index
    %1 = vector.load %arg2[%c0_1, %c0_2] : memref<1x96xf32, #tpu.memory_space<vmem>>, vector<1x96xf32>
    %c0_3 = arith.constant 0 : index
    %c0_4 = arith.constant 0 : index
    %2 = vector.load %arg3[%c0_3, %c0_4] : memref<32x32xf32, #tpu.memory_space<vmem>>, vector<32x32xf32>
    %c0_5 = arith.constant 0 : index
    %c0_6 = arith.constant 0 : index
    %3 = vector.load %arg4[%c0_5, %c0_6] : memref<1x32xf32, #tpu.memory_space<vmem>>, vector<1x32xf32>
    %c0_7 = arith.constant 0 : index
    %c0_8 = arith.constant 0 : index
    %4 = vector.load %arg5[%c0_7, %c0_8] : memref<1x32xf32, #tpu.memory_space<vmem>>, vector<1x32xf32>
    %c0_9 = arith.constant 0 : index
    %c0_10 = arith.constant 0 : index
    %5 = vector.load %arg6[%c0_9, %c0_10] : memref<1x32xf32, #tpu.memory_space<vmem>>, vector<1x32xf32>
    %c0_11 = arith.constant 0 : index
    %c0_12 = arith.constant 0 : index
    %6 = vector.load %arg7[%c0_11, %c0_12] : memref<32x64xf32, #tpu.memory_space<vmem>>, vector<32x64xf32>
    %c0_13 = arith.constant 0 : index
    %c0_14 = arith.constant 0 : index
    %7 = vector.load %arg8[%c0_13, %c0_14] : memref<1x64xf32, #tpu.memory_space<vmem>>, vector<1x64xf32>
    %c0_15 = arith.constant 0 : index
    %c0_16 = arith.constant 0 : index
    %8 = vector.load %arg9[%c0_15, %c0_16] : memref<64x32xf32, #tpu.memory_space<vmem>>, vector<64x32xf32>
    %c0_17 = arith.constant 0 : index
    %c0_18 = arith.constant 0 : index
    %9 = vector.load %arg10[%c0_17, %c0_18] : memref<1x32xf32, #tpu.memory_space<vmem>>, vector<1x32xf32>
    %c0_19 = arith.constant 0 : index
    %c0_20 = arith.constant 0 : index
    %10 = vector.load %arg11[%c0_19, %c0_20] : memref<1x32xf32, #tpu.memory_space<vmem>>, vector<1x32xf32>
    %c0_21 = arith.constant 0 : index
    %c0_22 = arith.constant 0 : index
    %11 = vector.load %arg12[%c0_21, %c0_22] : memref<1x32xf32, #tpu.memory_space<vmem>>, vector<1x32xf32>
    %c0_23 = arith.constant 0 : index
    %c0_24 = arith.constant 0 : index
    %c0_25 = arith.constant 0 : index
    %12 = vector.load %arg0[%c0_23, %c0_24, %c0_25] : memref<8x2x32xf32, #tpu.memory_space<vmem>>, vector<8x1x32xf32>
    %13 = vector.shape_cast %12 : vector<8x1x32xf32> to vector<8x32xf32>
    %cst = arith.constant dense<0.000000e+00> : vector<8x96xf32>
    %14 = tpu.matmul %13, %0, %cst {dimension_numbers = #tpu.dot_dimension_numbers<[1], [0], [0], [1], [0, 0, 1, 1], [], []>} : vector<8x32xf32>, vector<32x96xf32>, vector<8x96xf32> -> vector<8x96xf32>
    %15 = vector.broadcast %1 : vector<1x96xf32> to vector<8x96xf32>
    %16 = arith.addf %14, %15 : vector<8x96xf32>
    %17 = vector.extract_strided_slice %16 {offsets = [0, 0], sizes = [8, 8], strides = [1, 1]} : vector<8x96xf32> to vector<8x8xf32>
    %18 = vector.extract_strided_slice %16 {offsets = [0, 32], sizes = [8, 8], strides = [1, 1]} : vector<8x96xf32> to vector<8x8xf32>
    %19 = vector.extract_strided_slice %16 {offsets = [0, 64], sizes = [8, 8], strides = [1, 1]} : vector<8x96xf32> to vector<8x8xf32>
    %cst_26 = arith.constant dense<0.000000e+00> : vector<8x8xf32>
    %20 = tpu.matmul %17, %18, %cst_26 {dimension_numbers = #tpu.dot_dimension_numbers<[1], [1], [0], [0], [0, 0, 1, 0], [], []>} : vector<8x8xf32>, vector<8x8xf32>, vector<8x8xf32> -> vector<8x8xf32>
    %cst_27 = arith.constant dense<0xFF800000> : vector<8xf32>
    %21 = vector.multi_reduction <maximumf>, %20, %cst_27 [1] : vector<8x8xf32> to vector<8xf32>
    %22 = vector.shape_cast %21 : vector<8xf32> to vector<8x1xf32>
    %23 = vector.broadcast %22 : vector<8x1xf32> to vector<8x8xf32>
    %24 = arith.subf %20, %23 : vector<8x8xf32>
    %25 = math.exp %24 : vector<8x8xf32>
    %cst_28 = arith.constant dense<0.000000e+00> : vector<8xf32>
    %26 = vector.multi_reduction <add>, %25, %cst_28 [1] : vector<8x8xf32> to vector<8xf32>
    %27 = vector.shape_cast %26 : vector<8xf32> to vector<8x1xf32>
    %28 = tpu.reciprocal %27 {approx = true} : vector<8x1xf32> -> vector<8x1xf32>
    %29 = vector.broadcast %28 : vector<8x1xf32> to vector<8x8xf32>
    %30 = arith.mulf %25, %29 : vector<8x8xf32>
    %cst_29 = arith.constant dense<0.000000e+00> : vector<8x8xf32>
    %31 = tpu.matmul %30, %19, %cst_29 {dimension_numbers = #tpu.dot_dimension_numbers<[1], [0], [0], [1], [0, 0, 1, 1], [], []>} : vector<8x8xf32>, vector<8x8xf32>, vector<8x8xf32> -> vector<8x8xf32>
    %c0_30 = arith.constant 0 : index
    %c0_31 = arith.constant 0 : index
    %32 = vector.load %arg14[%c0_30, %c0_31] : memref<8x32xf32, #tpu.memory_space<vmem>>, vector<8x8xf32>
    tpu.vector_store %arg14[%c0_30, %c0_31], %31 {strides = array<i32>} : memref<8x32xf32, #tpu.memory_space<vmem>>, vector<8x8xf32>,
    %33 = vector.extract_strided_slice %16 {offsets = [0, 8], sizes = [8, 8], strides = [1, 1]} : vector<8x96xf32> to vector<8x8xf32>
    %34 = vector.extract_strided_slice %16 {offsets = [0, 40], sizes = [8, 8], strides = [1, 1]} : vector<8x96xf32> to vector<8x8xf32>
    %35 = vector.extract_strided_slice %16 {offsets = [0, 72], sizes = [8, 8], strides = [1, 1]} : vector<8x96xf32> to vector<8x8xf32>
    %cst_32 = arith.constant dense<0.000000e+00> : vector<8x8xf32>
    %36 = tpu.matmul %33, %34, %cst_32 {dimension_numbers = #tpu.dot_dimension_numbers<[1], [1], [0], [0], [0, 0, 1, 0], [], []>} : vector<8x8xf32>, vector<8x8xf32>, vector<8x8xf32> -> vector<8x8xf32>
    %cst_33 = arith.constant dense<0xFF800000> : vector<8xf32>
    %37 = vector.multi_reduction <maximumf>, %36, %cst_33 [1] : vector<8x8xf32> to vector<8xf32>
    %38 = vector.shape_cast %37 : vector<8xf32> to vector<8x1xf32>
    %39 = vector.broadcast %38 : vector<8x1xf32> to vector<8x8xf32>
    %40 = arith.subf %36, %39 : vector<8x8xf32>
    %41 = math.exp %40 : vector<8x8xf32>
    %cst_34 = arith.constant dense<0.000000e+00> : vector<8xf32>
    %42 = vector.multi_reduction <add>, %41, %cst_34 [1] : vector<8x8xf32> to vector<8xf32>
    %43 = vector.shape_cast %42 : vector<8xf32> to vector<8x1xf32>
    %44 = tpu.reciprocal %43 {approx = true} : vector<8x1xf32> -> vector<8x1xf32>
    %45 = vector.broadcast %44 : vector<8x1xf32> to vector<8x8xf32>
    %46 = arith.mulf %41, %45 : vector<8x8xf32>
    %cst_35 = arith.constant dense<0.000000e+00> : vector<8x8xf32>
    %47 = tpu.matmul %46, %35, %cst_35 {dimension_numbers = #tpu.dot_dimension_numbers<[1], [0], [0], [1], [0, 0, 1, 1], [], []>} : vector<8x8xf32>, vector<8x8xf32>, vector<8x8xf32> -> vector<8x8xf32>
    %c0_36 = arith.constant 0 : index
    %c8 = arith.constant 8 : index
    %48 = vector.load %arg14[%c0_36, %c8] : memref<8x32xf32, #tpu.memory_space<vmem>>, vector<8x8xf32>
    tpu.vector_store %arg14[%c0_36, %c8], %47 {strides = array<i32>} : memref<8x32xf32, #tpu.memory_space<vmem>>, vector<8x8xf32>,
    %49 = vector.extract_strided_slice %16 {offsets = [0, 16], sizes = [8, 8], strides = [1, 1]} : vector<8x96xf32> to vector<8x8xf32>
    %50 = vector.extract_strided_slice %16 {offsets = [0, 48], sizes = [8, 8], strides = [1, 1]} : vector<8x96xf32> to vector<8x8xf32>
    %51 = vector.extract_strided_slice %16 {offsets = [0, 80], sizes = [8, 8], strides = [1, 1]} : vector<8x96xf32> to vector<8x8xf32>
    %cst_37 = arith.constant dense<0.000000e+00> : vector<8x8xf32>
    %52 = tpu.matmul %49, %50, %cst_37 {dimension_numbers = #tpu.dot_dimension_numbers<[1], [1], [0], [0], [0, 0, 1, 0], [], []>} : vector<8x8xf32>, vector<8x8xf32>, vector<8x8xf32> -> vector<8x8xf32>
    %cst_38 = arith.constant dense<0xFF800000> : vector<8xf32>
    %53 = vector.multi_reduction <maximumf>, %52, %cst_38 [1] : vector<8x8xf32> to vector<8xf32>
    %54 = vector.shape_cast %53 : vector<8xf32> to vector<8x1xf32>
    %55 = vector.broadcast %54 : vector<8x1xf32> to vector<8x8xf32>
    %56 = arith.subf %52, %55 : vector<8x8xf32>
    %57 = math.exp %56 : vector<8x8xf32>
    %cst_39 = arith.constant dense<0.000000e+00> : vector<8xf32>
    %58 = vector.multi_reduction <add>, %57, %cst_39 [1] : vector<8x8xf32> to vector<8xf32>
    %59 = vector.shape_cast %58 : vector<8xf32> to vector<8x1xf32>
    %60 = tpu.reciprocal %59 {approx = true} : vector<8x1xf32> -> vector<8x1xf32>
    %61 = vector.broadcast %60 : vector<8x1xf32> to vector<8x8xf32>
    %62 = arith.mulf %57, %61 : vector<8x8xf32>
    %cst_40 = arith.constant dense<0.000000e+00> : vector<8x8xf32>
    %63 = tpu.matmul %62, %51, %cst_40 {dimension_numbers = #tpu.dot_dimension_numbers<[1], [0], [0], [1], [0, 0, 1, 1], [], []>} : vector<8x8xf32>, vector<8x8xf32>, vector<8x8xf32> -> vector<8x8xf32>
    %c0_41 = arith.constant 0 : index
    %c16 = arith.constant 16 : index
    %64 = vector.load %arg14[%c0_41, %c16] : memref<8x32xf32, #tpu.memory_space<vmem>>, vector<8x8xf32>
    tpu.vector_store %arg14[%c0_41, %c16], %63 {strides = array<i32>} : memref<8x32xf32, #tpu.memory_space<vmem>>, vector<8x8xf32>,
    %65 = vector.extract_strided_slice %16 {offsets = [0, 24], sizes = [8, 8], strides = [1, 1]} : vector<8x96xf32> to vector<8x8xf32>
    %66 = vector.extract_strided_slice %16 {offsets = [0, 56], sizes = [8, 8], strides = [1, 1]} : vector<8x96xf32> to vector<8x8xf32>
    %67 = vector.extract_strided_slice %16 {offsets = [0, 88], sizes = [8, 8], strides = [1, 1]} : vector<8x96xf32> to vector<8x8xf32>
    %cst_42 = arith.constant dense<0.000000e+00> : vector<8x8xf32>
    %68 = tpu.matmul %65, %66, %cst_42 {dimension_numbers = #tpu.dot_dimension_numbers<[1], [1], [0], [0], [0, 0, 1, 0], [], []>} : vector<8x8xf32>, vector<8x8xf32>, vector<8x8xf32> -> vector<8x8xf32>
    %cst_43 = arith.constant dense<0xFF800000> : vector<8xf32>
    %69 = vector.multi_reduction <maximumf>, %68, %cst_43 [1] : vector<8x8xf32> to vector<8xf32>
    %70 = vector.shape_cast %69 : vector<8xf32> to vector<8x1xf32>
    %71 = vector.broadcast %70 : vector<8x1xf32> to vector<8x8xf32>
    %72 = arith.subf %68, %71 : vector<8x8xf32>
    %73 = math.exp %72 : vector<8x8xf32>
    %cst_44 = arith.constant dense<0.000000e+00> : vector<8xf32>
    %74 = vector.multi_reduction <add>, %73, %cst_44 [1] : vector<8x8xf32> to vector<8xf32>
    %75 = vector.shape_cast %74 : vector<8xf32> to vector<8x1xf32>
    %76 = tpu.reciprocal %75 {approx = true} : vector<8x1xf32> -> vector<8x1xf32>
    %77 = vector.broadcast %76 : vector<8x1xf32> to vector<8x8xf32>
    %78 = arith.mulf %73, %77 : vector<8x8xf32>
    %cst_45 = arith.constant dense<0.000000e+00> : vector<8x8xf32>
    %79 = tpu.matmul %78, %67, %cst_45 {dimension_numbers = #tpu.dot_dimension_numbers<[1], [0], [0], [1], [0, 0, 1, 1], [], []>} : vector<8x8xf32>, vector<8x8xf32>, vector<8x8xf32> -> vector<8x8xf32>
    %c0_46 = arith.constant 0 : index
    %c24 = arith.constant 24 : index
    %80 = vector.load %arg14[%c0_46, %c24] : memref<8x32xf32, #tpu.memory_space<vmem>>, vector<8x8xf32>
    tpu.vector_store %arg14[%c0_46, %c24], %79 {strides = array<i32>} : memref<8x32xf32, #tpu.memory_space<vmem>>, vector<8x8xf32>,
    %c0_47 = arith.constant 0 : index
    %c0_48 = arith.constant 0 : index
    %81 = vector.load %arg14[%c0_47, %c0_48] : memref<8x32xf32, #tpu.memory_space<vmem>>, vector<8x32xf32>
    %cst_49 = arith.constant dense<0.000000e+00> : vector<8x32xf32>
    %82 = tpu.matmul %81, %2, %cst_49 {dimension_numbers = #tpu.dot_dimension_numbers<[1], [0], [0], [1], [0, 0, 1, 1], [], []>} : vector<8x32xf32>, vector<32x32xf32>, vector<8x32xf32> -> vector<8x32xf32>
    %83 = vector.broadcast %3 : vector<1x32xf32> to vector<8x32xf32>
    %84 = arith.addf %82, %83 : vector<8x32xf32>
    %85 = arith.addf %84, %13 : vector<8x32xf32>
    %cst_50 = arith.constant dense<0.000000e+00> : vector<32xf32>
    %86 = vector.multi_reduction <add>, %85, %cst_50 [0] : vector<8x32xf32> to vector<32xf32>
    %87 = vector.shape_cast %86 : vector<32xf32> to vector<1x32xf32>
    %cst_51 = arith.constant 8.000000e+00 : f32
    %88 = vector.broadcast %cst_51 : f32 to vector<1x32xf32>
    %89 = arith.divf %87, %88 : vector<1x32xf32>
    %90 = vector.broadcast %89 : vector<1x32xf32> to vector<8x32xf32>
    %91 = arith.subf %85, %90 : vector<8x32xf32>
    %92 = arith.mulf %91, %91 : vector<8x32xf32>
    %cst_52 = arith.constant dense<0.000000e+00> : vector<32xf32>
    %93 = vector.multi_reduction <add>, %92, %cst_52 [0] : vector<8x32xf32> to vector<32xf32>
    %94 = vector.shape_cast %93 : vector<32xf32> to vector<1x32xf32>
    %cst_53 = arith.constant 8.000000e+00 : f32
    %95 = vector.broadcast %cst_53 : f32 to vector<1x32xf32>
    %96 = arith.divf %94, %95 : vector<1x32xf32>
    %97 = vector.broadcast %89 : vector<1x32xf32> to vector<8x32xf32>
    %98 = arith.subf %85, %97 : vector<8x32xf32>
    %cst_54 = arith.constant 9.99999974E-6 : f32
    %99 = vector.broadcast %cst_54 : f32 to vector<1x32xf32>
    %100 = arith.addf %96, %99 : vector<1x32xf32>
    %101 = math.rsqrt %100 : vector<1x32xf32>
    %102 = vector.broadcast %101 : vector<1x32xf32> to vector<8x32xf32>
    %103 = arith.mulf %98, %102 : vector<8x32xf32>
    %104 = vector.broadcast %4 : vector<1x32xf32> to vector<8x32xf32>
    %105 = arith.mulf %103, %104 : vector<8x32xf32>
    %106 = vector.broadcast %5 : vector<1x32xf32> to vector<8x32xf32>
    %107 = arith.addf %105, %106 : vector<8x32xf32>
    %cst_55 = arith.constant dense<0.000000e+00> : vector<8x64xf32>
    %108 = tpu.matmul %107, %6, %cst_55 {dimension_numbers = #tpu.dot_dimension_numbers<[1], [0], [0], [1], [0, 0, 1, 1], [], []>} : vector<8x32xf32>, vector<32x64xf32>, vector<8x64xf32> -> vector<8x64xf32>
    %109 = vector.broadcast %7 : vector<1x64xf32> to vector<8x64xf32>
    %110 = arith.addf %108, %109 : vector<8x64xf32>
    %cst_56 = arith.constant 0.000000e+00 : f32
    %111 = vector.broadcast %cst_56 : f32 to vector<8x64xf32>
    %112 = arith.maximumf %110, %111 : vector<8x64xf32>
    %cst_57 = arith.constant dense<0.000000e+00> : vector<8x32xf32>
    %113 = tpu.matmul %112, %8, %cst_57 {dimension_numbers = #tpu.dot_dimension_numbers<[1], [0], [0], [1], [0, 0, 1, 1], [], []>} : vector<8x64xf32>, vector<64x32xf32>, vector<8x32xf32> -> vector<8x32xf32>
    %114 = vector.broadcast %9 : vector<1x32xf32> to vector<8x32xf32>
    %115 = arith.addf %113, %114 : vector<8x32xf32>
    %116 = arith.addf %115, %107 : vector<8x32xf32>
    %cst_58 = arith.constant dense<0.000000e+00> : vector<32xf32>
    %117 = vector.multi_reduction <add>, %116, %cst_58 [0] : vector<8x32xf32> to vector<32xf32>
    %118 = vector.shape_cast %117 : vector<32xf32> to vector<1x32xf32>
    %cst_59 = arith.constant 8.000000e+00 : f32
    %119 = vector.broadcast %cst_59 : f32 to vector<1x32xf32>
    %120 = arith.divf %118, %119 : vector<1x32xf32>
    %121 = vector.broadcast %120 : vector<1x32xf32> to vector<8x32xf32>
    %122 = arith.subf %116, %121 : vector<8x32xf32>
    %123 = arith.mulf %122, %122 : vector<8x32xf32>
    %cst_60 = arith.constant dense<0.000000e+00> : vector<32xf32>
    %124 = vector.multi_reduction <add>, %123, %cst_60 [0] : vector<8x32xf32> to vector<32xf32>
    %125 = vector.shape_cast %124 : vector<32xf32> to vector<1x32xf32>
    %cst_61 = arith.constant 8.000000e+00 : f32
    %126 = vector.broadcast %cst_61 : f32 to vector<1x32xf32>
    %127 = arith.divf %125, %126 : vector<1x32xf32>
    %128 = vector.broadcast %120 : vector<1x32xf32> to vector<8x32xf32>
    %129 = arith.subf %116, %128 : vector<8x32xf32>
    %cst_62 = arith.constant 9.99999974E-6 : f32
    %130 = vector.broadcast %cst_62 : f32 to vector<1x32xf32>
    %131 = arith.addf %127, %130 : vector<1x32xf32>
    %132 = math.rsqrt %131 : vector<1x32xf32>
    %133 = vector.broadcast %132 : vector<1x32xf32> to vector<8x32xf32>
    %134 = arith.mulf %129, %133 : vector<8x32xf32>
    %135 = vector.broadcast %10 : vector<1x32xf32> to vector<8x32xf32>
    %136 = arith.mulf %134, %135 : vector<8x32xf32>
    %137 = vector.broadcast %11 : vector<1x32xf32> to vector<8x32xf32>
    %138 = arith.addf %136, %137 : vector<8x32xf32>
    %c0_63 = arith.constant 0 : index
    %c0_64 = arith.constant 0 : index
    %c0_65 = arith.constant 0 : index
    %139 = vector.load %arg13[%c0_63, %c0_64, %c0_65] : memref<8x2x32xf32, #tpu.memory_space<vmem>>, vector<8x1x32xf32>
    %140 = vector.shape_cast %139 : vector<8x1x32xf32> to vector<8x32xf32>
    %141 = vector.shape_cast %138 : vector<8x32xf32> to vector<8x1x32xf32>
    tpu.vector_store %arg13[%c0_63, %c0_64, %c0_65], %141 {strides = array<i32>} : memref<8x2x32xf32, #tpu.memory_space<vmem>>, vector<8x1x32xf32>,
    %c0_66 = arith.constant 0 : index
    %c1 = arith.constant 1 : index
    %c0_67 = arith.constant 0 : index
    %142 = vector.load %arg0[%c0_66, %c1, %c0_67] : memref<8x2x32xf32, #tpu.memory_space<vmem>>, vector<8x1x32xf32>
    %143 = vector.shape_cast %142 : vector<8x1x32xf32> to vector<8x32xf32>
    %cst_68 = arith.constant dense<0.000000e+00> : vector<8x96xf32>
    %144 = tpu.matmul %143, %0, %cst_68 {dimension_numbers = #tpu.dot_dimension_numbers<[1], [0], [0], [1], [0, 0, 1, 1], [], []>} : vector<8x32xf32>, vector<32x96xf32>, vector<8x96xf32> -> vector<8x96xf32>
    %145 = vector.broadcast %1 : vector<1x96xf32> to vector<8x96xf32>
    %146 = arith.addf %144, %145 : vector<8x96xf32>
    %147 = vector.extract_strided_slice %146 {offsets = [0, 0], sizes = [8, 8], strides = [1, 1]} : vector<8x96xf32> to vector<8x8xf32>
    %148 = vector.extract_strided_slice %146 {offsets = [0, 32], sizes = [8, 8], strides = [1, 1]} : vector<8x96xf32> to vector<8x8xf32>
    %149 = vector.extract_strided_slice %146 {offsets = [0, 64], sizes = [8, 8], strides = [1, 1]} : vector<8x96xf32> to vector<8x8xf32>
    %cst_69 = arith.constant dense<0.000000e+00> : vector<8x8xf32>
    %150 = tpu.matmul %147, %148, %cst_69 {dimension_numbers = #tpu.dot_dimension_numbers<[1], [1], [0], [0], [0, 0, 1, 0], [], []>} : vector<8x8xf32>, vector<8x8xf32>, vector<8x8xf32> -> vector<8x8xf32>
    %cst_70 = arith.constant dense<0xFF800000> : vector<8xf32>
    %151 = vector.multi_reduction <maximumf>, %150, %cst_70 [1] : vector<8x8xf32> to vector<8xf32>
    %152 = vector.shape_cast %151 : vector<8xf32> to vector<8x1xf32>
    %153 = vector.broadcast %152 : vector<8x1xf32> to vector<8x8xf32>
    %154 = arith.subf %150, %153 : vector<8x8xf32>
    %155 = math.exp %154 : vector<8x8xf32>
    %cst_71 = arith.constant dense<0.000000e+00> : vector<8xf32>
    %156 = vector.multi_reduction <add>, %155, %cst_71 [1] : vector<8x8xf32> to vector<8xf32>
    %157 = vector.shape_cast %156 : vector<8xf32> to vector<8x1xf32>
    %158 = tpu.reciprocal %157 {approx = true} : vector<8x1xf32> -> vector<8x1xf32>
    %159 = vector.broadcast %158 : vector<8x1xf32> to vector<8x8xf32>
    %160 = arith.mulf %155, %159 : vector<8x8xf32>
    %cst_72 = arith.constant dense<0.000000e+00> : vector<8x8xf32>
    %161 = tpu.matmul %160, %149, %cst_72 {dimension_numbers = #tpu.dot_dimension_numbers<[1], [0], [0], [1], [0, 0, 1, 1], [], []>} : vector<8x8xf32>, vector<8x8xf32>, vector<8x8xf32> -> vector<8x8xf32>
    %c0_73 = arith.constant 0 : index
    %c0_74 = arith.constant 0 : index
    %162 = vector.load %arg14[%c0_73, %c0_74] : memref<8x32xf32, #tpu.memory_space<vmem>>, vector<8x8xf32>
    tpu.vector_store %arg14[%c0_73, %c0_74], %161 {strides = array<i32>} : memref<8x32xf32, #tpu.memory_space<vmem>>, vector<8x8xf32>,
    %163 = vector.extract_strided_slice %146 {offsets = [0, 8], sizes = [8, 8], strides = [1, 1]} : vector<8x96xf32> to vector<8x8xf32>
    %164 = vector.extract_strided_slice %146 {offsets = [0, 40], sizes = [8, 8], strides = [1, 1]} : vector<8x96xf32> to vector<8x8xf32>
    %165 = vector.extract_strided_slice %146 {offsets = [0, 72], sizes = [8, 8], strides = [1, 1]} : vector<8x96xf32> to vector<8x8xf32>
    %cst_75 = arith.constant dense<0.000000e+00> : vector<8x8xf32>
    %166 = tpu.matmul %163, %164, %cst_75 {dimension_numbers = #tpu.dot_dimension_numbers<[1], [1], [0], [0], [0, 0, 1, 0], [], []>} : vector<8x8xf32>, vector<8x8xf32>, vector<8x8xf32> -> vector<8x8xf32>
    %cst_76 = arith.constant dense<0xFF800000> : vector<8xf32>
    %167 = vector.multi_reduction <maximumf>, %166, %cst_76 [1] : vector<8x8xf32> to vector<8xf32>
    %168 = vector.shape_cast %167 : vector<8xf32> to vector<8x1xf32>
    %169 = vector.broadcast %168 : vector<8x1xf32> to vector<8x8xf32>
    %170 = arith.subf %166, %169 : vector<8x8xf32>
    %171 = math.exp %170 : vector<8x8xf32>
    %cst_77 = arith.constant dense<0.000000e+00> : vector<8xf32>
    %172 = vector.multi_reduction <add>, %171, %cst_77 [1] : vector<8x8xf32> to vector<8xf32>
    %173 = vector.shape_cast %172 : vector<8xf32> to vector<8x1xf32>
    %174 = tpu.reciprocal %173 {approx = true} : vector<8x1xf32> -> vector<8x1xf32>
    %175 = vector.broadcast %174 : vector<8x1xf32> to vector<8x8xf32>
    %176 = arith.mulf %171, %175 : vector<8x8xf32>
    %cst_78 = arith.constant dense<0.000000e+00> : vector<8x8xf32>
    %177 = tpu.matmul %176, %165, %cst_78 {dimension_numbers = #tpu.dot_dimension_numbers<[1], [0], [0], [1], [0, 0, 1, 1], [], []>} : vector<8x8xf32>, vector<8x8xf32>, vector<8x8xf32> -> vector<8x8xf32>
    %c0_79 = arith.constant 0 : index
    %c8_80 = arith.constant 8 : index
    %178 = vector.load %arg14[%c0_79, %c8_80] : memref<8x32xf32, #tpu.memory_space<vmem>>, vector<8x8xf32>
    tpu.vector_store %arg14[%c0_79, %c8_80], %177 {strides = array<i32>} : memref<8x32xf32, #tpu.memory_space<vmem>>, vector<8x8xf32>,
    %179 = vector.extract_strided_slice %146 {offsets = [0, 16], sizes = [8, 8], strides = [1, 1]} : vector<8x96xf32> to vector<8x8xf32>
    %180 = vector.extract_strided_slice %146 {offsets = [0, 48], sizes = [8, 8], strides = [1, 1]} : vector<8x96xf32> to vector<8x8xf32>
    %181 = vector.extract_strided_slice %146 {offsets = [0, 80], sizes = [8, 8], strides = [1, 1]} : vector<8x96xf32> to vector<8x8xf32>
    %cst_81 = arith.constant dense<0.000000e+00> : vector<8x8xf32>
    %182 = tpu.matmul %179, %180, %cst_81 {dimension_numbers = #tpu.dot_dimension_numbers<[1], [1], [0], [0], [0, 0, 1, 0], [], []>} : vector<8x8xf32>, vector<8x8xf32>, vector<8x8xf32> -> vector<8x8xf32>
    %cst_82 = arith.constant dense<0xFF800000> : vector<8xf32>
    %183 = vector.multi_reduction <maximumf>, %182, %cst_82 [1] : vector<8x8xf32> to vector<8xf32>
    %184 = vector.shape_cast %183 : vector<8xf32> to vector<8x1xf32>
    %185 = vector.broadcast %184 : vector<8x1xf32> to vector<8x8xf32>
    %186 = arith.subf %182, %185 : vector<8x8xf32>
    %187 = math.exp %186 : vector<8x8xf32>
    %cst_83 = arith.constant dense<0.000000e+00> : vector<8xf32>
    %188 = vector.multi_reduction <add>, %187, %cst_83 [1] : vector<8x8xf32> to vector<8xf32>
    %189 = vector.shape_cast %188 : vector<8xf32> to vector<8x1xf32>
    %190 = tpu.reciprocal %189 {approx = true} : vector<8x1xf32> -> vector<8x1xf32>
    %191 = vector.broadcast %190 : vector<8x1xf32> to vector<8x8xf32>
    %192 = arith.mulf %187, %191 : vector<8x8xf32>
    %cst_84 = arith.constant dense<0.000000e+00> : vector<8x8xf32>
    %193 = tpu.matmul %192, %181, %cst_84 {dimension_numbers = #tpu.dot_dimension_numbers<[1], [0], [0], [1], [0, 0, 1, 1], [], []>} : vector<8x8xf32>, vector<8x8xf32>, vector<8x8xf32> -> vector<8x8xf32>
    %c0_85 = arith.constant 0 : index
    %c16_86 = arith.constant 16 : index
    %194 = vector.load %arg14[%c0_85, %c16_86] : memref<8x32xf32, #tpu.memory_space<vmem>>, vector<8x8xf32>
    tpu.vector_store %arg14[%c0_85, %c16_86], %193 {strides = array<i32>} : memref<8x32xf32, #tpu.memory_space<vmem>>, vector<8x8xf32>,
    %195 = vector.extract_strided_slice %146 {offsets = [0, 24], sizes = [8, 8], strides = [1, 1]} : vector<8x96xf32> to vector<8x8xf32>
    %196 = vector.extract_strided_slice %146 {offsets = [0, 56], sizes = [8, 8], strides = [1, 1]} : vector<8x96xf32> to vector<8x8xf32>
    %197 = vector.extract_strided_slice %146 {offsets = [0, 88], sizes = [8, 8], strides = [1, 1]} : vector<8x96xf32> to vector<8x8xf32>
    %cst_87 = arith.constant dense<0.000000e+00> : vector<8x8xf32>
    %198 = tpu.matmul %195, %196, %cst_87 {dimension_numbers = #tpu.dot_dimension_numbers<[1], [1], [0], [0], [0, 0, 1, 0], [], []>} : vector<8x8xf32>, vector<8x8xf32>, vector<8x8xf32> -> vector<8x8xf32>
    %cst_88 = arith.constant dense<0xFF800000> : vector<8xf32>
    %199 = vector.multi_reduction <maximumf>, %198, %cst_88 [1] : vector<8x8xf32> to vector<8xf32>
    %200 = vector.shape_cast %199 : vector<8xf32> to vector<8x1xf32>
    %201 = vector.broadcast %200 : vector<8x1xf32> to vector<8x8xf32>
    %202 = arith.subf %198, %201 : vector<8x8xf32>
    %203 = math.exp %202 : vector<8x8xf32>
    %cst_89 = arith.constant dense<0.000000e+00> : vector<8xf32>
    %204 = vector.multi_reduction <add>, %203, %cst_89 [1] : vector<8x8xf32> to vector<8xf32>
    %205 = vector.shape_cast %204 : vector<8xf32> to vector<8x1xf32>
    %206 = tpu.reciprocal %205 {approx = true} : vector<8x1xf32> -> vector<8x1xf32>
    %207 = vector.broadcast %206 : vector<8x1xf32> to vector<8x8xf32>
    %208 = arith.mulf %203, %207 : vector<8x8xf32>
    %cst_90 = arith.constant dense<0.000000e+00> : vector<8x8xf32>
    %209 = tpu.matmul %208, %197, %cst_90 {dimension_numbers = #tpu.dot_dimension_numbers<[1], [0], [0], [1], [0, 0, 1, 1], [], []>} : vector<8x8xf32>, vector<8x8xf32>, vector<8x8xf32> -> vector<8x8xf32>
    %c0_91 = arith.constant 0 : index
    %c24_92 = arith.constant 24 : index
    %210 = vector.load %arg14[%c0_91, %c24_92] : memref<8x32xf32, #tpu.memory_space<vmem>>, vector<8x8xf32>
    tpu.vector_store %arg14[%c0_91, %c24_92], %209 {strides = array<i32>} : memref<8x32xf32, #tpu.memory_space<vmem>>, vector<8x8xf32>,
    %c0_93 = arith.constant 0 : index
    %c0_94 = arith.constant 0 : index
    %211 = vector.load %arg14[%c0_93, %c0_94] : memref<8x32xf32, #tpu.memory_space<vmem>>, vector<8x32xf32>
    %cst_95 = arith.constant dense<0.000000e+00> : vector<8x32xf32>
    %212 = tpu.matmul %211, %2, %cst_95 {dimension_numbers = #tpu.dot_dimension_numbers<[1], [0], [0], [1], [0, 0, 1, 1], [], []>} : vector<8x32xf32>, vector<32x32xf32>, vector<8x32xf32> -> vector<8x32xf32>
    %213 = vector.broadcast %3 : vector<1x32xf32> to vector<8x32xf32>
    %214 = arith.addf %212, %213 : vector<8x32xf32>
    %215 = arith.addf %214, %143 : vector<8x32xf32>
    %cst_96 = arith.constant dense<0.000000e+00> : vector<32xf32>
    %216 = vector.multi_reduction <add>, %215, %cst_96 [0] : vector<8x32xf32> to vector<32xf32>
    %217 = vector.shape_cast %216 : vector<32xf32> to vector<1x32xf32>
    %cst_97 = arith.constant 8.000000e+00 : f32
    %218 = vector.broadcast %cst_97 : f32 to vector<1x32xf32>
    %219 = arith.divf %217, %218 : vector<1x32xf32>
    %220 = vector.broadcast %219 : vector<1x32xf32> to vector<8x32xf32>
    %221 = arith.subf %215, %220 : vector<8x32xf32>
    %222 = arith.mulf %221, %221 : vector<8x32xf32>
    %cst_98 = arith.constant dense<0.000000e+00> : vector<32xf32>
    %223 = vector.multi_reduction <add>, %222, %cst_98 [0] : vector<8x32xf32> to vector<32xf32>
    %224 = vector.shape_cast %223 : vector<32xf32> to vector<1x32xf32>
    %cst_99 = arith.constant 8.000000e+00 : f32
    %225 = vector.broadcast %cst_99 : f32 to vector<1x32xf32>
    %226 = arith.divf %224, %225 : vector<1x32xf32>
    %227 = vector.broadcast %219 : vector<1x32xf32> to vector<8x32xf32>
    %228 = arith.subf %215, %227 : vector<8x32xf32>
    %cst_100 = arith.constant 9.99999974E-6 : f32
    %229 = vector.broadcast %cst_100 : f32 to vector<1x32xf32>
    %230 = arith.addf %226, %229 : vector<1x32xf32>
    %231 = math.rsqrt %230 : vector<1x32xf32>
    %232 = vector.broadcast %231 : vector<1x32xf32> to vector<8x32xf32>
    %233 = arith.mulf %228, %232 : vector<8x32xf32>
    %234 = vector.broadcast %4 : vector<1x32xf32> to vector<8x32xf32>
    %235 = arith.mulf %233, %234 : vector<8x32xf32>
    %236 = vector.broadcast %5 : vector<1x32xf32> to vector<8x32xf32>
    %237 = arith.addf %235, %236 : vector<8x32xf32>
    %cst_101 = arith.constant dense<0.000000e+00> : vector<8x64xf32>
    %238 = tpu.matmul %237, %6, %cst_101 {dimension_numbers = #tpu.dot_dimension_numbers<[1], [0], [0], [1], [0, 0, 1, 1], [], []>} : vector<8x32xf32>, vector<32x64xf32>, vector<8x64xf32> -> vector<8x64xf32>
    %239 = vector.broadcast %7 : vector<1x64xf32> to vector<8x64xf32>
    %240 = arith.addf %238, %239 : vector<8x64xf32>
    %cst_102 = arith.constant 0.000000e+00 : f32
    %241 = vector.broadcast %cst_102 : f32 to vector<8x64xf32>
    %242 = arith.maximumf %240, %241 : vector<8x64xf32>
    %cst_103 = arith.constant dense<0.000000e+00> : vector<8x32xf32>
    %243 = tpu.matmul %242, %8, %cst_103 {dimension_numbers = #tpu.dot_dimension_numbers<[1], [0], [0], [1], [0, 0, 1, 1], [], []>} : vector<8x64xf32>, vector<64x32xf32>, vector<8x32xf32> -> vector<8x32xf32>
    %244 = vector.broadcast %9 : vector<1x32xf32> to vector<8x32xf32>
    %245 = arith.addf %243, %244 : vector<8x32xf32>
    %246 = arith.addf %245, %237 : vector<8x32xf32>
    %cst_104 = arith.constant dense<0.000000e+00> : vector<32xf32>
    %247 = vector.multi_reduction <add>, %246, %cst_104 [0] : vector<8x32xf32> to vector<32xf32>
    %248 = vector.shape_cast %247 : vector<32xf32> to vector<1x32xf32>
    %cst_105 = arith.constant 8.000000e+00 : f32
    %249 = vector.broadcast %cst_105 : f32 to vector<1x32xf32>
    %250 = arith.divf %248, %249 : vector<1x32xf32>
    %251 = vector.broadcast %250 : vector<1x32xf32> to vector<8x32xf32>
    %252 = arith.subf %246, %251 : vector<8x32xf32>
    %253 = arith.mulf %252, %252 : vector<8x32xf32>
    %cst_106 = arith.constant dense<0.000000e+00> : vector<32xf32>
    %254 = vector.multi_reduction <add>, %253, %cst_106 [0] : vector<8x32xf32> to vector<32xf32>
    %255 = vector.shape_cast %254 : vector<32xf32> to vector<1x32xf32>
    %cst_107 = arith.constant 8.000000e+00 : f32
    %256 = vector.broadcast %cst_107 : f32 to vector<1x32xf32>
    %257 = arith.divf %255, %256 : vector<1x32xf32>
    %258 = vector.broadcast %250 : vector<1x32xf32> to vector<8x32xf32>
    %259 = arith.subf %246, %258 : vector<8x32xf32>
    %cst_108 = arith.constant 9.99999974E-6 : f32
    %260 = vector.broadcast %cst_108 : f32 to vector<1x32xf32>
    %261 = arith.addf %257, %260 : vector<1x32xf32>
    %262 = math.rsqrt %261 : vector<1x32xf32>
    %263 = vector.broadcast %262 : vector<1x32xf32> to vector<8x32xf32>
    %264 = arith.mulf %259, %263 : vector<8x32xf32>
    %265 = vector.broadcast %10 : vector<1x32xf32> to vector<8x32xf32>
    %266 = arith.mulf %264, %265 : vector<8x32xf32>
    %267 = vector.broadcast %11 : vector<1x32xf32> to vector<8x32xf32>
    %268 = arith.addf %266, %267 : vector<8x32xf32>
    %c0_109 = arith.constant 0 : index
    %c1_110 = arith.constant 1 : index
    %c0_111 = arith.constant 0 : index
    %269 = vector.load %arg13[%c0_109, %c1_110, %c0_111] : memref<8x2x32xf32, #tpu.memory_space<vmem>>, vector<8x1x32xf32>
    %270 = vector.shape_cast %269 : vector<8x1x32xf32> to vector<8x32xf32>
    %271 = vector.shape_cast %268 : vector<8x32xf32> to vector<8x1x32xf32>
    tpu.vector_store %arg13[%c0_109, %c1_110, %c0_111], %271 {strides = array<i32>} : memref<8x2x32xf32, #tpu.memory_space<vmem>>, vector<8x1x32xf32>,
    return
  }
}

</mosaic_0001>

<llo_original>
// kernel: tpu_custom_call.1
$region0: #{tpu_custom_call.1}
  #allocation0 [shape = 'u32[]', space=smem, size = 0x4, offset = 0x4, fixed_abs, tag = 'smem constant byte address 0x4 - core index']
  #allocation1 [shape = 'u32[144,128]{1,0:T(1,128)}', space=vmem, size = 0x12000, scoped, tag = 'internal scratch']
  #allocation2 [shape = 'f32[8,32]{1,0:T(8,128)}', space=vmem, size = 0x1000, scoped, tag = 'scratch operand']
  %s0 = inlined_call_operand.hbm [shape: f32[8,2,32], index: 0, kind: input, shape index: {}]
  %s1 = inlined_call_operand.vmem [shape: f32[32,96], index: 1, kind: input, shape index: {}]
  %s2 = inlined_call_operand.vmem [shape: f32[1,96], index: 2, kind: input, shape index: {}]
  %s3 = inlined_call_operand.vmem [shape: f32[32,32], index: 3, kind: input, shape index: {}]
  %s4 = inlined_call_operand.vmem [shape: f32[1,32], index: 4, kind: input, shape index: {}]
  %s5 = inlined_call_operand.hbm [shape: f32[1,32], index: 5, kind: input, shape index: {}]
  %s6 = inlined_call_operand.hbm [shape: f32[1,32], index: 6, kind: input, shape index: {}]
  %s7 = inlined_call_operand.vmem [shape: f32[32,64], index: 7, kind: input, shape index: {}]
  %s8 = inlined_call_operand.hbm [shape: f32[1,64], index: 8, kind: input, shape index: {}]
  %s9 = inlined_call_operand.vmem [shape: f32[64,32], index: 9, kind: input, shape index: {}]
  %s10 = inlined_call_operand.vmem [shape: f32[1,32], index: 10, kind: input, shape index: {}]
  %s11 = inlined_call_operand.vmem [shape: f32[1,32], index: 11, kind: input, shape index: {}]
  %s12 = inlined_call_operand.vmem [shape: f32[1,32], index: 12, kind: input, shape index: {}]
  %s13 = inlined_call_operand.hbm [shape: f32[8,2,32], index: 13, kind: output, shape index: {}]
  %s14 = sld [smem:[#allocation0]]
  $region78: #{tpu_custom_call.1} parent=0
    _
  %s16 = ssub.s32 1, %s14
  %s17 = scalar_select 0, %s16, %s14
  $region1: #{tpu_custom_call.1} parent=0
    #allocation3 [shape = 'u8[8192]{0}', space=vmem, size = 0x2000, scoped, tag = 'input window, operand 0, single buffered']
    #allocation4 [shape = 's32[1]{0}', space=sflag, size = 0x4, scoped, tag = 'scoped memory for tpu_custom_call.1']
    #allocation5 [shape = 's32[1]{0}', space=sflag, size = 0x4, scoped, tag = 'scoped memory for tpu_custom_call.1']
    #allocation6 [shape = 'u8[512]{0}', space=vmem, size = 0x400, scoped, tag = 'input window, operand 5, single buffered']
    #allocation7 [shape = 's32[1]{0}', space=sflag, size = 0x4, scoped, tag = 'scoped memory for tpu_custom_call.1']
    #allocation8 [shape = 'u8[512]{0}', space=vmem, size = 0x400, scoped, tag = 'input window, operand 6, single buffered']
    #allocation9 [shape = 'u8[512]{0}', space=vmem, size = 0x400, scoped, tag = 'input window, operand 8, single buffered']
    #allocation10 [shape = 's32[1]{0}', space=sflag, size = 0x4, scoped, tag = 'scoped memory for tpu_custom_call.1']
    #allocation11 [shape = 'u8[8192]{0}', space=vmem, size = 0x2000, scoped, tag = 'output window, operand 0, single buffered']
    %18 = vsyncpa [#allocation4], 0
    %19 = vsyncpa [#allocation7], 0
    %20 = vsyncpa [#allocation10], 0
    %21 = vsyncpa [#allocation5], 0
    // Predicated region
    $region2: #{tpu_custom_call.1} parent=1 // pred_check
      _
    $region3: #{tpu_custom_call.1} parent=1 // pred_check_branch
      %23 = sbr.rel (0) target = $region5
    $region4: #{tpu_custom_call.1} parent=1 // pred_region
      %s25 = ssub.s32 256, 256
      %26 = vsyncadd [#allocation4], %s25
      %s27 = sshll.u32 [#allocation3], 4
      %s28 = int_to_ptr.vmem [resolvable:$true] %s27
      %33 = dma.hbm_to_vmem [thread:$0]  %s0, 256, %s28, [#allocation4], 32, 32, 2
    $region5: #{tpu_custom_call.1} parent=1 // pred_fallthru
      _
    // Predicated region
    $region6: #{tpu_custom_call.1} parent=1 // pred_check
      _
    $region7: #{tpu_custom_call.1} parent=1 // pred_check_branch
      %35 = sbr.rel (0) target = $region9
    $region8: #{tpu_custom_call.1} parent=1 // pred_region
      _
    $region9: #{tpu_custom_call.1} parent=1 // pred_fallthru
      _
    // Predicated region
    $region10: #{tpu_custom_call.1} parent=1 // pred_check
      _
    $region11: #{tpu_custom_call.1} parent=1 // pred_check_branch
      %37 = sbr.rel (0) target = $region13
    $region12: #{tpu_custom_call.1} parent=1 // pred_region
      _
    $region13: #{tpu_custom_call.1} parent=1 // pred_fallthru
      _
    // Predicated region
    $region14: #{tpu_custom_call.1} parent=1 // pred_check
      _
    $region15: #{tpu_custom_call.1} parent=1 // pred_check_branch
      %39 = sbr.rel (0) target = $region17
    $region16: #{tpu_custom_call.1} parent=1 // pred_region
      _
    $region17: #{tpu_custom_call.1} parent=1 // pred_fallthru
      _
    // Predicated region
    $region18: #{tpu_custom_call.1} parent=1 // pred_check
      _
    $region19: #{tpu_custom_call.1} parent=1 // pred_check_branch
      %41 = sbr.rel (0) target = $region21
    $region20: #{tpu_custom_call.1} parent=1 // pred_region
      _
    $region21: #{tpu_custom_call.1} parent=1 // pred_fallthru
      _
    // Predicated region
    $region22: #{tpu_custom_call.1} parent=1 // pred_check
      _
    $region23: #{tpu_custom_call.1} parent=1 // pred_check_branch
      %43 = sbr.rel (0) target = $region25
    $region24: #{tpu_custom_call.1} parent=1 // pred_region
      %s45 = ssub.s32 16, 16
      %46 = vsyncadd [#allocation7], %s45
      %s48 = sshll.u32 [#allocation6], 4
      %s49 = int_to_ptr.vmem [resolvable:$true] %s48
      %51 = dma.hbm_to_vmem [thread:$0]  %s5, 16, %s49, [#allocation7]
    $region25: #{tpu_custom_call.1} parent=1 // pred_fallthru
      _
    // Predicated region
    $region26: #{tpu_custom_call.1} parent=1 // pred_check
      _
    $region27: #{tpu_custom_call.1} parent=1 // pred_check_branch
      %53 = sbr.rel (0) target = $region29
    $region28: #{tpu_custom_call.1} parent=1 // pred_region
      %s55 = ssub.s32 16, 16
      %56 = vsyncadd [#allocation7], %s55
      %s58 = sshll.u32 [#allocation8], 4
      %s59 = int_to_ptr.vmem [resolvable:$true] %s58
      %61 = dma.hbm_to_vmem [thread:$0]  %s6, 16, %s59, [#allocation7]
    $region29: #{tpu_custom_call.1} parent=1 // pred_fallthru
      _
    // Predicated region
    $region30: #{tpu_custom_call.1} parent=1 // pred_check
      _
    $region31: #{tpu_custom_call.1} parent=1 // pred_check_branch
      %63 = sbr.rel (0) target = $region33
    $region32: #{tpu_custom_call.1} parent=1 // pred_region
      _
    $region33: #{tpu_custom_call.1} parent=1 // pred_fallthru
      _
    // Predicated region
    $region34: #{tpu_custom_call.1} parent=1 // pred_check
      _
    $region35: #{tpu_custom_call.1} parent=1 // pred_check_branch
      %65 = sbr.rel (0) target = $region37
    $region36: #{tpu_custom_call.1} parent=1 // pred_region
      %s67 = ssub.s32 16, 16
      %68 = vsyncadd [#allocation10], %s67
      %s70 = sshll.u32 [#allocation9], 4
      %s71 = int_to_ptr.vmem [resolvable:$true] %s70
      %73 = dma.hbm_to_vmem [thread:$0]  %s8, 16, %s71, [#allocation10]
    $region37: #{tpu_custom_call.1} parent=1 // pred_fallthru
      _
    // Predicated region
    $region38: #{tpu_custom_call.1} parent=1 // pred_check
      _
    $region39: #{tpu_custom_call.1} parent=1 // pred_check_branch
      %75 = sbr.rel (0) target = $region41
    $region40: #{tpu_custom_call.1} parent=1 // pred_region
      _
    $region41: #{tpu_custom_call.1} parent=1 // pred_fallthru
      _
    // Predicated region
    $region42: #{tpu_custom_call.1} parent=1 // pred_check
      _
    $region43: #{tpu_custom_call.1} parent=1 // pred_check_branch
      %77 = sbr.rel (0) target = $region45
    $region44: #{tpu_custom_call.1} parent=1 // pred_region
      _
    $region45: #{tpu_custom_call.1} parent=1 // pred_fallthru
      _
    // Predicated region
    $region46: #{tpu_custom_call.1} parent=1 // pred_check
      _
    $region47: #{tpu_custom_call.1} parent=1 // pred_check_branch
      %79 = sbr.rel (0) target = $region49
    $region48: #{tpu_custom_call.1} parent=1 // pred_region
      _
    $region49: #{tpu_custom_call.1} parent=1 // pred_fallthru
      _
    // Predicated region
    $region50: #{tpu_custom_call.1} parent=1 // pred_check
      _
    $region51: #{tpu_custom_call.1} parent=1 // pred_check_branch
      %81 = sbr.rel (0) target = $region53
    $region52: #{tpu_custom_call.1} parent=1 // pred_region
      _
    $region53: #{tpu_custom_call.1} parent=1 // pred_fallthru
      _
    // Predicated region
    $region54: #{tpu_custom_call.1} parent=1 // pred_check
      _
    $region55: #{tpu_custom_call.1} parent=1 // pred_check_branch
      %83 = sbr.rel (0) target = $region57
    $region56: #{tpu_custom_call.1} parent=1 // pred_region
      %84 = dma.done [#allocation4], 256
    $region57: #{tpu_custom_call.1} parent=1 // pred_fallthru
      _
    // Predicated region
    $region58: #{tpu_custom_call.1} parent=1 // pred_check
      _
    $region59: #{tpu_custom_call.1} parent=1 // pred_check_branch
      %86 = sbr.rel (0) target = $region61
    $region60: #{tpu_custom_call.1} parent=1 // pred_region
      %87 = dma.done [#allocation7], 16
    $region61: #{tpu_custom_call.1} parent=1 // pred_fallthru
      _
    // Predicated region
    $region62: #{tpu_custom_call.1} parent=1 // pred_check
      _
    $region63: #{tpu_custom_call.1} parent=1 // pred_check_branch
      %89 = sbr.rel (0) target = $region65
    $region64: #{tpu_custom_call.1} parent=1 // pred_region
      %90 = dma.done [#allocation7], 16
    $region65: #{tpu_custom_call.1} parent=1 // pred_fallthru
      _
    // Predicated region
    $region66: #{tpu_custom_call.1} parent=1 // pred_check
      _
    $region67: #{tpu_custom_call.1} parent=1 // pred_check_branch
      %92 = sbr.rel (0) target = $region69
    $region68: #{tpu_custom_call.1} parent=1 // pred_region
      %93 = dma.done [#allocation10], 16
    $region69: #{tpu_custom_call.1} parent=1 // pred_fallthru
      _
    %v94 = vld [vmem:[%s1] sm:$0xff]
    %v95 = vld [vmem:[%s1 + $0x8] sm:$0xff]
    %v96 = vld [vmem:[%s1 + $0x10] sm:$0xff]
    %v97 = vld [vmem:[%s1 + $0x18] sm:$0xff]
    %v98 = vld [vmem:[%s2] sm:$0x1]
    %v99 = vld [vmem:[%s3] sm:$0xff]
    %v100 = vld [vmem:[%s3 + $0x8] sm:$0xff]
    %v101 = vld [vmem:[%s3 + $0x10] sm:$0xff]
    %v102 = vld [vmem:[%s3 + $0x18] sm:$0xff]
    %v103 = vld [vmem:[%s4] sm:$0x1]
    %v104 = vld [vmem:[#allocation6] sm:$0x1]
    %v105 = vld [vmem:[#allocation8] sm:$0x1]
    %v106 = vld [vmem:[%s7] sm:$0xff]
    %v107 = vld [vmem:[%s7 + $0x8] sm:$0xff]
    %v108 = vld [vmem:[%s7 + $0x10] sm:$0xff]
    %v109 = vld [vmem:[%s7 + $0x18] sm:$0xff]
    %v110 = vld [vmem:[#allocation9] sm:$0x1]
    %v111 = vld [vmem:[%s9] sm:$0xff]
    %v112 = vld [vmem:[%s9 + $0x8] sm:$0xff]
    %v113 = vld [vmem:[%s9 + $0x10] sm:$0xff]
    %v114 = vld [vmem:[%s9 + $0x18] sm:$0xff]
    %v115 = vld [vmem:[%s9 + $0x20] sm:$0xff]
    %v116 = vld [vmem:[%s9 + $0x28] sm:$0xff]
    %v117 = vld [vmem:[%s9 + $0x30] sm:$0xff]
    %v118 = vld [vmem:[%s9 + $0x38] sm:$0xff]
    %v119 = vld [vmem:[%s10] sm:$0x1]
    %v120 = vld [vmem:[%s11] sm:$0x1]
    %v121 = vld [vmem:[%s12] sm:$0x1]
    %v122 = vld [vmem:[#allocation3] sm:$0x1]
    %v123 = vld [vmem:[#allocation3 + $0x2] sm:$0x1]
    %v124 = vld [vmem:[#allocation3 + $0x4] sm:$0x1]
    %v125 = vld [vmem:[#allocation3 + $0x6] sm:$0x1]
    %v126 = vld [vmem:[#allocation3 + $0x8] sm:$0x1]
    %v127 = vld [vmem:[#allocation3 + $0xa] sm:$0x1]
    %v128 = vld [vmem:[#allocation3 + $0xc] sm:$0x1]
    %v129 = vld [vmem:[#allocation3 + $0xe] sm:$0x1]
    %v131 = vlaneseq
    %v132 = vshrl.u32 %v131, 7
    %v133 = vsub.s32 0, %v132
    %v134 = vrot.slane %v98, %v133
    %v144 = vrot.slane %v123, 7
    %vm145 = vcmask 1041409
    %v146 = vsel %vm145, %v144, %v122
    %v147 = vrot.slane %v124, 6
    %vm148 = vcmask 1042434
    %v149 = vsel %vm148, %v147, %v146
    %v150 = vrot.slane %v125, 5
    %vm151 = vcmask 1043459
    %v152 = vsel %vm151, %v150, %v149
    %v153 = vrot.slane %v126, 4
    %vm154 = vcmask 1044484
    %v155 = vsel %vm154, %v153, %v152
    %v156 = vrot.slane %v127, 3
    %vm157 = vcmask 1045509
    %v158 = vsel %vm157, %v156, %v155
    %v159 = vrot.slane %v128, 2
    %vm160 = vcmask 1046534
    %v161 = vsel %vm160, %v159, %v158
    %v162 = vrot.slane %v129, 1
    %vm163 = vcmask 1047559
    %v164 = vsel %vm163, %v162, %v161
    %vm165 = vcmask 261120
    %v166 = vsel %vm165, %v164, 0
    %168 = vmatprep.subr.mxu0 0.0
    %169 = vmatpush1.msra.mxu0 %v94
    %170 = vmatprep.subr.mxu0 0.0
    %171 = vmatpush1.msra.mxu0 %v95
    %172 = vmatprep.subr.mxu0 0.0
    %173 = vmatpush1.msra.mxu0 %v96
    %174 = vmatprep.subr.mxu0 0.0
    %175 = vmatpush1.msra.mxu0 %v97
    %176 = vmatprep.subr.mxu0 0.0
    %177 = vmatpush1.msra.mxu0 0.0
    %178 = vmatprep.subr.mxu0 0.0
    %179 = vmatpush1.msra.mxu0 0.0
    %180 = vmatprep.subr.mxu0 0.0
    %181 = vmatpush1.msra.mxu0 0.0
    %182 = vmatprep.subr.mxu0 0.0
    %183 = vmatpush1.msra.mxu0 0.0
    %184 = vmatprep.subr.mxu0 0.0
    %185 = vmatpush1.msra.mxu0 0.0
    %186 = vmatprep.subr.mxu0 0.0
    %187 = vmatpush1.msra.mxu0 0.0
    %188 = vmatprep.subr.mxu0 0.0
    %189 = vmatpush1.msra.mxu0 0.0
    %190 = vmatprep.subr.mxu0 0.0
    %191 = vmatpush1.msra.mxu0 0.0
    %192 = vmatprep.subr.mxu0 0.0
    %193 = vmatpush1.msra.mxu0 0.0
    %194 = vmatprep.subr.mxu0 0.0
    %195 = vmatpush1.msra.mxu0 0.0
    %196 = vmatprep.subr.mxu0 0.0
    %197 = vmatpush1.msra.mxu0 0.0
    %198 = vmatprep.subr.mxu0 0.0
    %199 = vmatpush1.msra.mxu0 0.0
    %200 = vmatprep.subr.mxu0 0.0
    %201 = vmatpush1.msra.mxu0 0.0
    %202 = vmatprep.subr.mxu0 0.0
    %203 = vmatpush1.msra.mxu0 0.0
    %204 = vmatprep.subr.mxu0 0.0
    %205 = vmatpush1.msra.mxu0 0.0
    %206 = vmatprep.subr.mxu0 0.0
    %207 = vmatpush1.msra.mxu0 0.0
    %208 = vmatprep.subr.mxu0 0.0
    %209 = vmatpush1.msra.mxu0 0.0
    %210 = vmatprep.subr.mxu0 0.0
    %211 = vmatpush1.msra.mxu0 0.0
    %212 = vmatprep.subr.mxu0 0.0
    %213 = vmatpush1.msra.mxu0 0.0
    %214 = vmatprep.subr.mxu0 0.0
    %215 = vmatpush1.msra.mxu0 0.0
    %216 = vmatprep.subr.mxu0 0.0
    %217 = vmatpush1.msra.mxu0 0.0
    %218 = vmatprep.subr.mxu0 0.0
    %219 = vmatpush1.msra.mxu0 0.0
    %220 = vmatprep.subr.mxu0 0.0
    %221 = vmatpush1.msra.mxu0 0.0
    %222 = vmatprep.subr.mxu0 0.0
    %223 = vmatpush1.msra.mxu0 0.0
    %224 = vmatprep.subr.mxu0 0.0
    %225 = vmatpush1.msra.mxu0 0.0
    %226 = vmatprep.subr.mxu0 0.0
    %227 = vmatpush1.msra.mxu0 0.0
    %228 = vmatprep.subr.mxu0 0.0
    %229 = vmatpush1.msra.mxu0 0.0
    %230 = vmatprep.subr.mxu0 0.0
    %231 = vmatpush1.msra.mxu0 0.0
    %232 = vmatprep.mubr.f32.mxu0 0.0
    %233 = vmatmul.mubr.f32.gmra.mrb[0].mxu0 %v166
    %v234 = vpop.f32.mrb[0].mxu0
    %v235 = vadd.f32 %v134, %v234
    %v236 = vpop.f32.mrb[0].mxu0
    %237 = vdwg.mxu0
    %239 = vrot.lane.b32.xlu0 %v235, 96
    %v240 = vpop.permute.xlu0 %239
    %vm241 = vcmask 64512
    %v242 = vsel %vm241, %v235, 0
    %v244 = vsel %vm241, %v240, 0
    %246 = vmatprep.subr.mxu0 0.0
    %247 = vmatpush1.xpose.msra.mxu0 %v244
    %248 = vmatprep.subr.mxu0 0.0
    %249 = vmatpush1.xpose.msra.mxu0 0.0
    %250 = vmatprep.subr.mxu0 0.0
    %251 = vmatpush1.xpose.msra.mxu0 0.0
    %252 = vmatprep.subr.mxu0 0.0
    %253 = vmatpush1.xpose.msra.mxu0 0.0
    %254 = vmatprep.subr.mxu0 0.0
    %255 = vmatpush1.xpose.msra.mxu0 0.0
    %256 = vmatprep.subr.mxu0 0.0
    %257 = vmatpush1.xpose.msra.mxu0 0.0
    %258 = vmatprep.subr.mxu0 0.0
    %259 = vmatpush1.xpose.msra.mxu0 0.0
    %260 = vmatprep.subr.mxu0 0.0
    %261 = vmatpush1.xpose.msra.mxu0 0.0
    %262 = vmatprep.subr.mxu0 0.0
    %263 = vmatpush1.xpose.msra.mxu0 0.0
    %264 = vmatprep.subr.mxu0 0.0
    %265 = vmatpush1.xpose.msra.mxu0 0.0
    %266 = vmatprep.subr.mxu0 0.0
    %267 = vmatpush1.xpose.msra.mxu0 0.0
    %268 = vmatprep.subr.mxu0 0.0
    %269 = vmatpush1.xpose.msra.mxu0 0.0
    %270 = vmatprep.subr.mxu0 0.0
    %271 = vmatpush1.xpose.msra.mxu0 0.0
    %272 = vmatprep.subr.mxu0 0.0
    %273 = vmatpush1.xpose.msra.mxu0 0.0
    %274 = vmatprep.subr.mxu0 0.0
    %275 = vmatpush1.xpose.msra.mxu0 0.0
    %276 = vmatprep.subr.mxu0 0.0
    %277 = vmatpush1.xpose.msra.mxu0 0.0
    %278 = vmatprep.subr.mxu0 0.0
    %279 = vmatpush1.xpose.msra.mxu0 0.0
    %280 = vmatprep.subr.mxu0 0.0
    %281 = vmatpush1.xpose.msra.mxu0 0.0
    %282 = vmatprep.subr.mxu0 0.0
    %283 = vmatpush1.xpose.msra.mxu0 0.0
    %284 = vmatprep.subr.mxu0 0.0
    %285 = vmatpush1.xpose.msra.mxu0 0.0
    %286 = vmatprep.subr.mxu0 0.0
    %287 = vmatpush1.xpose.msra.mxu0 0.0
    %288 = vmatprep.subr.mxu0 0.0
    %289 = vmatpush1.xpose.msra.mxu0 0.0
    %290 = vmatprep.subr.mxu0 0.0
    %291 = vmatpush1.xpose.msra.mxu0 0.0
    %292 = vmatprep.subr.mxu0 0.0
    %293 = vmatpush1.xpose.msra.mxu0 0.0
    %294 = vmatprep.subr.mxu0 0.0
    %295 = vmatpush1.xpose.msra.mxu0 0.0
    %296 = vmatprep.subr.mxu0 0.0
    %297 = vmatpush1.xpose.msra.mxu0 0.0
    %298 = vmatprep.subr.mxu0 0.0
    %299 = vmatpush1.xpose.msra.mxu0 0.0
    %300 = vmatprep.subr.mxu0 0.0
    %301 = vmatpush1.xpose.msra.mxu0 0.0
    %302 = vmatprep.subr.mxu0 0.0
    %303 = vmatpush1.xpose.msra.mxu0 0.0
    %304 = vmatprep.subr.mxu0 0.0
    %305 = vmatpush1.xpose.msra.mxu0 0.0
    %306 = vmatprep.subr.mxu0 0.0
    %307 = vmatpush1.xpose.msra.mxu0 0.0
    %308 = vmatprep.subr.mxu0 0.0
    %309 = vmatpush1.xpose.msra.mxu0 0.0
    %310 = vmatprep.mubr.f32.mxu0 0.0
    %311 = vmatmul.mubr.f32.gmra.mrb[0].mxu0 %v242
    %v312 = vpop.f32.mrb[0].mxu0
    %v313 = vadd.f32 0.0, %v312
    %v314 = vpop.f32.mrb[0].mxu0
    %315 = vdwg.mxu0
    %v316 = vsel %vm241, %v313, -inf
    %317 = vmax.xlane.f32.xlu0 %v316
    %v318 = vpop.xlane.xlu0 %317
    %v319 = vsub.f32 %v313, %v318
    %v320 = vmul.f32 %v319, 1.442695
    %v321 = vpow.pop %v320
    %v322 = vsel %vm241, %v321, 0.0
    %323 = vadd.xlane.f32.xlu0 %v322
    %v324 = vpop.xlane.xlu0 %323
    %v325 = vrcp.pop %v324
    %v326 = vmul.f32 %v321, %v325
    %327 = vrot.lane.b32.xlu0 %v235, 64
    %v328 = vpop.permute.xlu0 %327
    %v331 = vsel %vm241, %v326, 0
    %333 = vmatprep.subr.mxu0 0.0
    %334 = vmatpush1.msra.mxu0 %v328
    %335 = vmatprep.subr.mxu0 0.0
    %336 = vmatpush1.msra.mxu0 0.0
    %337 = vmatprep.subr.mxu0 0.0
    %338 = vmatpush1.msra.mxu0 0.0
    %339 = vmatprep.subr.mxu0 0.0
    %340 = vmatpush1.msra.mxu0 0.0
    %341 = vmatprep.subr.mxu0 0.0
    %342 = vmatpush1.msra.mxu0 0.0
    %343 = vmatprep.subr.mxu0 0.0
    %344 = vmatpush1.msra.mxu0 0.0
    %345 = vmatprep.subr.mxu0 0.0
    %346 = vmatpush1.msra.mxu0 0.0
    %347 = vmatprep.subr.mxu0 0.0
    %348 = vmatpush1.msra.mxu0 0.0
    %349 = vmatprep.subr.mxu0 0.0
    %350 = vmatpush1.msra.mxu0 0.0
    %351 = vmatprep.subr.mxu0 0.0
    %352 = vmatpush1.msra.mxu0 0.0
    %353 = vmatprep.subr.mxu0 0.0
    %354 = vmatpush1.msra.mxu0 0.0
    %355 = vmatprep.subr.mxu0 0.0
    %356 = vmatpush1.msra.mxu0 0.0
    %357 = vmatprep.subr.mxu0 0.0
    %358 = vmatpush1.msra.mxu0 0.0
    %359 = vmatprep.subr.mxu0 0.0
    %360 = vmatpush1.msra.mxu0 0.0
    %361 = vmatprep.subr.mxu0 0.0
    %362 = vmatpush1.msra.mxu0 0.0
    %363 = vmatprep.subr.mxu0 0.0
    %364 = vmatpush1.msra.mxu0 0.0
    %365 = vmatprep.subr.mxu0 0.0
    %366 = vmatpush1.msra.mxu0 0.0
    %367 = vmatprep.subr.mxu0 0.0
    %368 = vmatpush1.msra.mxu0 0.0
    %369 = vmatprep.subr.mxu0 0.0
    %370 = vmatpush1.msra.mxu0 0.0
    %371 = vmatprep.subr.mxu0 0.0
    %372 = vmatpush1.msra.mxu0 0.0
    %373 = vmatprep.subr.mxu0 0.0
    %374 = vmatpush1.msra.mxu0 0.0
    %375 = vmatprep.subr.mxu0 0.0
    %376 = vmatpush1.msra.mxu0 0.0
    %377 = vmatprep.subr.mxu0 0.0
    %378 = vmatpush1.msra.mxu0 0.0
    %379 = vmatprep.subr.mxu0 0.0
    %380 = vmatpush1.msra.mxu0 0.0
    %381 = vmatprep.subr.mxu0 0.0
    %382 = vmatpush1.msra.mxu0 0.0
    %383 = vmatprep.subr.mxu0 0.0
    %384 = vmatpush1.msra.mxu0 0.0
    %385 = vmatprep.subr.mxu0 0.0
    %386 = vmatpush1.msra.mxu0 0.0
    %387 = vmatprep.subr.mxu0 0.0
    %388 = vmatpush1.msra.mxu0 0.0
    %389 = vmatprep.subr.mxu0 0.0
    %390 = vmatpush1.msra.mxu0 0.0
    %391 = vmatprep.subr.mxu0 0.0
    %392 = vmatpush1.msra.mxu0 0.0
    %393 = vmatprep.subr.mxu0 0.0
    %394 = vmatpush1.msra.mxu0 0.0
    %395 = vmatprep.subr.mxu0 0.0
    %396 = vmatpush1.msra.mxu0 0.0
    %397 = vmatprep.mubr.f32.mxu0 0.0
    %398 = vmatmul.mubr.f32.gmra.mrb[0].mxu0 %v331
    %v399 = vpop.f32.mrb[0].mxu0
    %v400 = vadd.f32 0.0, %v399
    %v401 = vpop.f32.mrb[0].mxu0
    %402 = vdwg.mxu0
    %403 = vst.msk [vmem:[#allocation2] sm:$0xff] %vm241, %v400
    %404 = vrot.lane.b32.xlu0 %v235, 120
    %v405 = vpop.permute.xlu0 %404
    %406 = vrot.lane.b32.xlu0 %v235, 88
    %v407 = vpop.permute.xlu0 %406
    %v408 = vsel %vm241, %v405, 0
    %v410 = vsel %vm241, %v407, 0
    %412 = vmatprep.subr.mxu0 0.0
    %413 = vmatpush1.xpose.msra.mxu0 %v410
    %414 = vmatprep.subr.mxu0 0.0
    %415 = vmatpush1.xpose.msra.mxu0 0.0
    %416 = vmatprep.subr.mxu0 0.0
    %417 = vmatpush1.xpose.msra.mxu0 0.0
    %418 = vmatprep.subr.mxu0 0.0
    %419 = vmatpush1.xpose.msra.mxu0 0.0
    %420 = vmatprep.subr.mxu0 0.0
    %421 = vmatpush1.xpose.msra.mxu0 0.0
    %422 = vmatprep.subr.mxu0 0.0
    %423 = vmatpush1.xpose.msra.mxu0 0.0
    %424 = vmatprep.subr.mxu0 0.0
    %425 = vmatpush1.xpose.msra.mxu0 0.0
    %426 = vmatprep.subr.mxu0 0.0
    %427 = vmatpush1.xpose.msra.mxu0 0.0
    %428 = vmatprep.subr.mxu0 0.0
    %429 = vmatpush1.xpose.msra.mxu0 0.0
    %430 = vmatprep.subr.mxu0 0.0
    %431 = vmatpush1.xpose.msra.mxu0 0.0
    %432 = vmatprep.subr.mxu0 0.0
    %433 = vmatpush1.xpose.msra.mxu0 0.0
    %434 = vmatprep.subr.mxu0 0.0
    %435 = vmatpush1.xpose.msra.mxu0 0.0
    %436 = vmatprep.subr.mxu0 0.0
    %437 = vmatpush1.xpose.msra.mxu0 0.0
    %438 = vmatprep.subr.mxu0 0.0
    %439 = vmatpush1.xpose.msra.mxu0 0.0
    %440 = vmatprep.subr.mxu0 0.0
    %441 = vmatpush1.xpose.msra.mxu0 0.0
    %442 = vmatprep.subr.mxu0 0.0
    %443 = vmatpush1.xpose.msra.mxu0 0.0
    %444 = vmatprep.subr.mxu0 0.0
    %445 = vmatpush1.xpose.msra.mxu0 0.0
    %446 = vmatprep.subr.mxu0 0.0
    %447 = vmatpush1.xpose.msra.mxu0 0.0
    %448 = vmatprep.subr.mxu0 0.0
    %449 = vmatpush1.xpose.msra.mxu0 0.0
    %450 = vmatprep.subr.mxu0 0.0
    %451 = vmatpush1.xpose.msra.mxu0 0.0
    %452 = vmatprep.subr.mxu0 0.0
    %453 = vmatpush1.xpose.msra.mxu0 0.0
    %454 = vmatprep.subr.mxu0 0.0
    %455 = vmatpush1.xpose.msra.mxu0 0.0
    %456 = vmatprep.subr.mxu0 0.0
    %457 = vmatpush1.xpose.msra.mxu0 0.0
    %458 = vmatprep.subr.mxu0 0.0
    %459 = vmatpush1.xpose.msra.mxu0 0.0
    %460 = vmatprep.subr.mxu0 0.0
    %461 = vmatpush1.xpose.msra.mxu0 0.0
    %462 = vmatprep.subr.mxu0 0.0
    %463 = vmatpush1.xpose.msra.mxu0 0.0
    %464 = vmatprep.subr.mxu0 0.0
    %465 = vmatpush1.xpose.msra.mxu0 0.0
    %466 = vmatprep.subr.mxu0 0.0
    %467 = vmatpush1.xpose.msra.mxu0 0.0
    %468 = vmatprep.subr.mxu0 0.0
    %469 = vmatpush1.xpose.msra.mxu0 0.0
    %470 = vmatprep.subr.mxu0 0.0
    %471 = vmatpush1.xpose.msra.mxu0 0.0
    %472 = vmatprep.subr.mxu0 0.0
    %473 = vmatpush1.xpose.msra.mxu0 0.0
    %474 = vmatprep.subr.mxu0 0.0
    %475 = vmatpush1.xpose.msra.mxu0 0.0
    %476 = vmatprep.mubr.f32.mxu0 0.0
    %477 = vmatmul.mubr.f32.gmra.mrb[0].mxu0 %v408
    %v478 = vpop.f32.mrb[0].mxu0
    %v479 = vadd.f32 0.0, %v478
    %v480 = vpop.f32.mrb[0].mxu0
    %481 = vdwg.mxu0
    %v482 = vsel %vm241, %v479, -inf
    %483 = vmax.xlane.f32.xlu0 %v482
    %v484 = vpop.xlane.xlu0 %483
    %v485 = vsub.f32 %v479, %v484
    %v486 = vmul.f32 %v485, 1.442695
    %v487 = vpow.pop %v486
    %v488 = vsel %vm241, %v487, 0.0
    %489 = vadd.xlane.f32.xlu0 %v488
    %v490 = vpop.xlane.xlu0 %489
    %v491 = vrcp.pop %v490
    %v492 = vmul.f32 %v487, %v491
    %493 = vrot.lane.b32.xlu0 %v235, 56
    %v494 = vpop.permute.xlu0 %493
    %v497 = vsel %vm241, %v492, 0
    %499 = vmatprep.subr.mxu0 0.0
    %500 = vmatpush1.msra.mxu0 %v494
    %501 = vmatprep.subr.mxu0 0.0
    %502 = vmatpush1.msra.mxu0 0.0
    %503 = vmatprep.subr.mxu0 0.0
    %504 = vmatpush1.msra.mxu0 0.0
    %505 = vmatprep.subr.mxu0 0.0
    %506 = vmatpush1.msra.mxu0 0.0
    %507 = vmatprep.subr.mxu0 0.0
    %508 = vmatpush1.msra.mxu0 0.0
    %509 = vmatprep.subr.mxu0 0.0
    %510 = vmatpush1.msra.mxu0 0.0
    %511 = vmatprep.subr.mxu0 0.0
    %512 = vmatpush1.msra.mxu0 0.0
    %513 = vmatprep.subr.mxu0 0.0
    %514 = vmatpush1.msra.mxu0 0.0
    %515 = vmatprep.subr.mxu0 0.0
    %516 = vmatpush1.msra.mxu0 0.0
    %517 = vmatprep.subr.mxu0 0.0
    %518 = vmatpush1.msra.mxu0 0.0
    %519 = vmatprep.subr.mxu0 0.0
    %520 = vmatpush1.msra.mxu0 0.0
    %521 = vmatprep.subr.mxu0 0.0
    %522 = vmatpush1.msra.mxu0 0.0
    %523 = vmatprep.subr.mxu0 0.0
    %524 = vmatpush1.msra.mxu0 0.0
    %525 = vmatprep.subr.mxu0 0.0
    %526 = vmatpush1.msra.mxu0 0.0
    %527 = vmatprep.subr.mxu0 0.0
    %528 = vmatpush1.msra.mxu0 0.0
    %529 = vmatprep.subr.mxu0 0.0
    %530 = vmatpush1.msra.mxu0 0.0
    %531 = vmatprep.subr.mxu0 0.0
    %532 = vmatpush1.msra.mxu0 0.0
    %533 = vmatprep.subr.mxu0 0.0
    %534 = vmatpush1.msra.mxu0 0.0
    %535 = vmatprep.subr.mxu0 0.0
    %536 = vmatpush1.msra.mxu0 0.0
    %537 = vmatprep.subr.mxu0 0.0
    %538 = vmatpush1.msra.mxu0 0.0
    %539 = vmatprep.subr.mxu0 0.0
    %540 = vmatpush1.msra.mxu0 0.0
    %541 = vmatprep.subr.mxu0 0.0
    %542 = vmatpush1.msra.mxu0 0.0
    %543 = vmatprep.subr.mxu0 0.0
    %544 = vmatpush1.msra.mxu0 0.0
    %545 = vmatprep.subr.mxu0 0.0
    %546 = vmatpush1.msra.mxu0 0.0
    %547 = vmatprep.subr.mxu0 0.0
    %548 = vmatpush1.msra.mxu0 0.0
    %549 = vmatprep.subr.mxu0 0.0
    %550 = vmatpush1.msra.mxu0 0.0
    %551 = vmatprep.subr.mxu0 0.0
    %552 = vmatpush1.msra.mxu0 0.0
    %553 = vmatprep.subr.mxu0 0.0
    %554 = vmatpush1.msra.mxu0 0.0
    %555 = vmatprep.subr.mxu0 0.0
    %556 = vmatpush1.msra.mxu0 0.0
    %557 = vmatprep.subr.mxu0 0.0
    %558 = vmatpush1.msra.mxu0 0.0
    %559 = vmatprep.subr.mxu0 0.0
    %560 = vmatpush1.msra.mxu0 0.0
    %561 = vmatprep.subr.mxu0 0.0
    %562 = vmatpush1.msra.mxu0 0.0
    %563 = vmatprep.mubr.f32.mxu0 0.0
    %564 = vmatmul.mubr.f32.gmra.mrb[0].mxu0 %v497
    %v565 = vpop.f32.mrb[0].mxu0
    %v566 = vadd.f32 0.0, %v565
    %v567 = vpop.f32.mrb[0].mxu0
    %568 = vdwg.mxu0
    %570 = vrot.lane.b32.xlu0 %v566, 8
    %v571 = vpop.permute.xlu0 %570
    %vm573 = vcmask 130112
    %574 = vst.msk [vmem:[#allocation2] sm:$0xff] %vm573, %v571
    %575 = vrot.lane.b32.xlu0 %v235, 112
    %v576 = vpop.permute.xlu0 %575
    %577 = vrot.lane.b32.xlu0 %v235, 80
    %v578 = vpop.permute.xlu0 %577
    %v579 = vsel %vm241, %v576, 0
    %v581 = vsel %vm241, %v578, 0
    %583 = vmatprep.subr.mxu0 0.0
    %584 = vmatpush1.xpose.msra.mxu0 %v581
    %585 = vmatprep.subr.mxu0 0.0
    %586 = vmatpush1.xpose.msra.mxu0 0.0
    %587 = vmatprep.subr.mxu0 0.0
    %588 = vmatpush1.xpose.msra.mxu0 0.0
    %589 = vmatprep.subr.mxu0 0.0
    %590 = vmatpush1.xpose.msra.mxu0 0.0
    %591 = vmatprep.subr.mxu0 0.0
    %592 = vmatpush1.xpose.msra.mxu0 0.0
    %593 = vmatprep.subr.mxu0 0.0
    %594 = vmatpush1.xpose.msra.mxu0 0.0
    %595 = vmatprep.subr.mxu0 0.0
    %596 = vmatpush1.xpose.msra.mxu0 0.0
    %597 = vmatprep.subr.mxu0 0.0
    %598 = vmatpush1.xpose.msra.mxu0 0.0
    %599 = vmatprep.subr.mxu0 0.0
    %600 = vmatpush1.xpose.msra.mxu0 0.0
    %601 = vmatprep.subr.mxu0 0.0
    %602 = vmatpush1.xpose.msra.mxu0 0.0
    %603 = vmatprep.subr.mxu0 0.0
    %604 = vmatpush1.xpose.msra.mxu0 0.0
    %605 = vmatprep.subr.mxu0 0.0
    %606 = vmatpush1.xpose.msra.mxu0 0.0
    %607 = vmatprep.subr.mxu0 0.0
    %608 = vmatpush1.xpose.msra.mxu0 0.0
    %609 = vmatprep.subr.mxu0 0.0
    %610 = vmatpush1.xpose.msra.mxu0 0.0
    %611 = vmatprep.subr.mxu0 0.0
    %612 = vmatpush1.xpose.msra.mxu0 0.0
    %613 = vmatprep.subr.mxu0 0.0
    %614 = vmatpush1.xpose.msra.mxu0 0.0
    %615 = vmatprep.subr.mxu0 0.0
    %616 = vmatpush1.xpose.msra.mxu0 0.0
    %617 = vmatprep.subr.mxu0 0.0
    %618 = vmatpush1.xpose.msra.mxu0 0.0
    %619 = vmatprep.subr.mxu0 0.0
    %620 = vmatpush1.xpose.msra.mxu0 0.0
    %621 = vmatprep.subr.mxu0 0.0
    %622 = vmatpush1.xpose.msra.mxu0 0.0
    %623 = vmatprep.subr.mxu0 0.0
    %624 = vmatpush1.xpose.msra.mxu0 0.0
    %625 = vmatprep.subr.mxu0 0.0
    %626 = vmatpush1.xpose.msra.mxu0 0.0
    %627 = vmatprep.subr.mxu0 0.0
    %628 = vmatpush1.xpose.msra.mxu0 0.0
    %629 = vmatprep.subr.mxu0 0.0
    %630 = vmatpush1.xpose.msra.mxu0 0.0
    %631 = vmatprep.subr.mxu0 0.0
    %632 = vmatpush1.xpose.msra.mxu0 0.0
    %633 = vmatprep.subr.mxu0 0.0
    %634 = vmatpush1.xpose.msra.mxu0 0.0
    %635 = vmatprep.subr.mxu0 0.0
    %636 = vmatpush1.xpose.msra.mxu0 0.0
    %637 = vmatprep.subr.mxu0 0.0
    %638 = vmatpush1.xpose.msra.mxu0 0.0
    %639 = vmatprep.subr.mxu0 0.0
    %640 = vmatpush1.xpose.msra.mxu0 0.0
    %641 = vmatprep.subr.mxu0 0.0
    %642 = vmatpush1.xpose.msra.mxu0 0.0
    %643 = vmatprep.subr.mxu0 0.0
    %644 = vmatpush1.xpose.msra.mxu0 0.0
    %645 = vmatprep.subr.mxu0 0.0
    %646 = vmatpush1.xpose.msra.mxu0 0.0
    %647 = vmatprep.mubr.f32.mxu0 0.0
    %648 = vmatmul.mubr.f32.gmra.mrb[0].mxu0 %v579
    %v649 = vpop.f32.mrb[0].mxu0
    %v650 = vadd.f32 0.0, %v649
    %v651 = vpop.f32.mrb[0].mxu0
    %652 = vdwg.mxu0
    %v653 = vsel %vm241, %v650, -inf
    %654 = vmax.xlane.f32.xlu0 %v653
    %v655 = vpop.xlane.xlu0 %654
    %v656 = vsub.f32 %v650, %v655
    %v657 = vmul.f32 %v656, 1.442695
    %v658 = vpow.pop %v657
    %v659 = vsel %vm241, %v658, 0.0
    %660 = vadd.xlane.f32.xlu0 %v659
    %v661 = vpop.xlane.xlu0 %660
    %v662 = vrcp.pop %v661
    %v663 = vmul.f32 %v658, %v662
    %664 = vrot.lane.b32.xlu0 %v235, 48
    %v665 = vpop.permute.xlu0 %664
    %v668 = vsel %vm241, %v663, 0
    %670 = vmatprep.subr.mxu0 0.0
    %671 = vmatpush1.msra.mxu0 %v665
    %672 = vmatprep.subr.mxu0 0.0
    %673 = vmatpush1.msra.mxu0 0.0
    %674 = vmatprep.subr.mxu0 0.0
    %675 = vmatpush1.msra.mxu0 0.0
    %676 = vmatprep.subr.mxu0 0.0
    %677 = vmatpush1.msra.mxu0 0.0
    %678 = vmatprep.subr.mxu0 0.0
    %679 = vmatpush1.msra.mxu0 0.0
    %680 = vmatprep.subr.mxu0 0.0
    %681 = vmatpush1.msra.mxu0 0.0
    %682 = vmatprep.subr.mxu0 0.0
    %683 = vmatpush1.msra.mxu0 0.0
    %684 = vmatprep.subr.mxu0 0.0
    %685 = vmatpush1.msra.mxu0 0.0
    %686 = vmatprep.subr.mxu0 0.0
    %687 = vmatpush1.msra.mxu0 0.0
    %688 = vmatprep.subr.mxu0 0.0
    %689 = vmatpush1.msra.mxu0 0.0
    %690 = vmatprep.subr.mxu0 0.0
    %691 = vmatpush1.msra.mxu0 0.0
    %692 = vmatprep.subr.mxu0 0.0
    %693 = vmatpush1.msra.mxu0 0.0
    %694 = vmatprep.subr.mxu0 0.0
    %695 = vmatpush1.msra.mxu0 0.0
    %696 = vmatprep.subr.mxu0 0.0
    %697 = vmatpush1.msra.mxu0 0.0
    %698 = vmatprep.subr.mxu0 0.0
    %699 = vmatpush1.msra.mxu0 0.0
    %700 = vmatprep.subr.mxu0 0.0
    %701 = vmatpush1.msra.mxu0 0.0
    %702 = vmatprep.subr.mxu0 0.0
    %703 = vmatpush1.msra.mxu0 0.0
    %704 = vmatprep.subr.mxu0 0.0
    %705 = vmatpush1.msra.mxu0 0.0
    %706 = vmatprep.subr.mxu0 0.0
    %707 = vmatpush1.msra.mxu0 0.0
    %708 = vmatprep.subr.mxu0 0.0
    %709 = vmatpush1.msra.mxu0 0.0
    %710 = vmatprep.subr.mxu0 0.0
    %711 = vmatpush1.msra.mxu0 0.0
    %712 = vmatprep.subr.mxu0 0.0
    %713 = vmatpush1.msra.mxu0 0.0
    %714 = vmatprep.subr.mxu0 0.0
    %715 = vmatpush1.msra.mxu0 0.0
    %716 = vmatprep.subr.mxu0 0.0
    %717 = vmatpush1.msra.mxu0 0.0
    %718 = vmatprep.subr.mxu0 0.0
    %719 = vmatpush1.msra.mxu0 0.0
    %720 = vmatprep.subr.mxu0 0.0
    %721 = vmatpush1.msra.mxu0 0.0
    %722 = vmatprep.subr.mxu0 0.0
    %723 = vmatpush1.msra.mxu0 0.0
    %724 = vmatprep.subr.mxu0 0.0
    %725 = vmatpush1.msra.mxu0 0.0
    %726 = vmatprep.subr.mxu0 0.0
    %727 = vmatpush1.msra.mxu0 0.0
    %728 = vmatprep.subr.mxu0 0.0
    %729 = vmatpush1.msra.mxu0 0.0
    %730 = vmatprep.subr.mxu0 0.0
    %731 = vmatpush1.msra.mxu0 0.0
    %732 = vmatprep.subr.mxu0 0.0
    %733 = vmatpush1.msra.mxu0 0.0
    %734 = vmatprep.mubr.f32.mxu0 0.0
    %735 = vmatmul.mubr.f32.gmra.mrb[0].mxu0 %v668
    %v736 = vpop.f32.mrb[0].mxu0
    %v737 = vadd.f32 0.0, %v736
    %v738 = vpop.f32.mrb[0].mxu0
    %739 = vdwg.mxu0
    %741 = vrot.lane.b32.xlu0 %v737, 16
    %v742 = vpop.permute.xlu0 %741
    %vm744 = vcmask 195712
    %745 = vst.msk [vmem:[#allocation2] sm:$0xff] %vm744, %v742
    %746 = vrot.lane.b32.xlu0 %v235, 104
    %v747 = vpop.permute.xlu0 %746
    %748 = vrot.lane.b32.xlu0 %v235, 72
    %v749 = vpop.permute.xlu0 %748
    %v750 = vsel %vm241, %v747, 0
    %v752 = vsel %vm241, %v749, 0
    %754 = vmatprep.subr.mxu0 0.0
    %755 = vmatpush1.xpose.msra.mxu0 %v752
    %756 = vmatprep.subr.mxu0 0.0
    %757 = vmatpush1.xpose.msra.mxu0 0.0
    %758 = vmatprep.subr.mxu0 0.0
    %759 = vmatpush1.xpose.msra.mxu0 0.0
    %760 = vmatprep.subr.mxu0 0.0
    %761 = vmatpush1.xpose.msra.mxu0 0.0
    %762 = vmatprep.subr.mxu0 0.0
    %763 = vmatpush1.xpose.msra.mxu0 0.0
    %764 = vmatprep.subr.mxu0 0.0
    %765 = vmatpush1.xpose.msra.mxu0 0.0
    %766 = vmatprep.subr.mxu0 0.0
    %767 = vmatpush1.xpose.msra.mxu0 0.0
    %768 = vmatprep.subr.mxu0 0.0
    %769 = vmatpush1.xpose.msra.mxu0 0.0
    %770 = vmatprep.subr.mxu0 0.0
    %771 = vmatpush1.xpose.msra.mxu0 0.0
    %772 = vmatprep.subr.mxu0 0.0
    %773 = vmatpush1.xpose.msra.mxu0 0.0
    %774 = vmatprep.subr.mxu0 0.0
    %775 = vmatpush1.xpose.msra.mxu0 0.0
    %776 = vmatprep.subr.mxu0 0.0
    %777 = vmatpush1.xpose.msra.mxu0 0.0
    %778 = vmatprep.subr.mxu0 0.0
    %779 = vmatpush1.xpose.msra.mxu0 0.0
    %780 = vmatprep.subr.mxu0 0.0
    %781 = vmatpush1.xpose.msra.mxu0 0.0
    %782 = vmatprep.subr.mxu0 0.0
    %783 = vmatpush1.xpose.msra.mxu0 0.0
    %784 = vmatprep.subr.mxu0 0.0
    %785 = vmatpush1.xpose.msra.mxu0 0.0
    %786 = vmatprep.subr.mxu0 0.0
    %787 = vmatpush1.xpose.msra.mxu0 0.0
    %788 = vmatprep.subr.mxu0 0.0
    %789 = vmatpush1.xpose.msra.mxu0 0.0
    %790 = vmatprep.subr.mxu0 0.0
    %791 = vmatpush1.xpose.msra.mxu0 0.0
    %792 = vmatprep.subr.mxu0 0.0
    %793 = vmatpush1.xpose.msra.mxu0 0.0
    %794 = vmatprep.subr.mxu0 0.0
    %795 = vmatpush1.xpose.msra.mxu0 0.0
    %796 = vmatprep.subr.mxu0 0.0
    %797 = vmatpush1.xpose.msra.mxu0 0.0
    %798 = vmatprep.subr.mxu0 0.0
    %799 = vmatpush1.xpose.msra.mxu0 0.0
    %800 = vmatprep.subr.mxu0 0.0
    %801 = vmatpush1.xpose.msra.mxu0 0.0
    %802 = vmatprep.subr.mxu0 0.0
    %803 = vmatpush1.xpose.msra.mxu0 0.0
    %804 = vmatprep.subr.mxu0 0.0
    %805 = vmatpush1.xpose.msra.mxu0 0.0
    %806 = vmatprep.subr.mxu0 0.0
    %807 = vmatpush1.xpose.msra.mxu0 0.0
    %808 = vmatprep.subr.mxu0 0.0
    %809 = vmatpush1.xpose.msra.mxu0 0.0
    %810 = vmatprep.subr.mxu0 0.0
    %811 = vmatpush1.xpose.msra.mxu0 0.0
    %812 = vmatprep.subr.mxu0 0.0
    %813 = vmatpush1.xpose.msra.mxu0 0.0
    %814 = vmatprep.subr.mxu0 0.0
    %815 = vmatpush1.xpose.msra.mxu0 0.0
    %816 = vmatprep.subr.mxu0 0.0
    %817 = vmatpush1.xpose.msra.mxu0 0.0
    %818 = vmatprep.mubr.f32.mxu0 0.0
    %819 = vmatmul.mubr.f32.gmra.mrb[0].mxu0 %v750
    %v820 = vpop.f32.mrb[0].mxu0
    %v821 = vadd.f32 0.0, %v820
    %v822 = vpop.f32.mrb[0].mxu0
    %823 = vdwg.mxu0
    %v824 = vsel %vm241, %v821, -inf
    %825 = vmax.xlane.f32.xlu0 %v824
    %v826 = vpop.xlane.xlu0 %825
    %v827 = vsub.f32 %v821, %v826
    %v828 = vmul.f32 %v827, 1.442695
    %v829 = vpow.pop %v828
    %v830 = vsel %vm241, %v829, 0.0
    %831 = vadd.xlane.f32.xlu0 %v830
    %v832 = vpop.xlane.xlu0 %831
    %v833 = vrcp.pop %v832
    %v834 = vmul.f32 %v829, %v833
    %835 = vrot.lane.b32.xlu0 %v235, 40
    %v836 = vpop.permute.xlu0 %835
    %v839 = vsel %vm241, %v834, 0
    %841 = vmatprep.subr.mxu0 0.0
    %842 = vmatpush1.msra.mxu0 %v836
    %843 = vmatprep.subr.mxu0 0.0
    %844 = vmatpush1.msra.mxu0 0.0
    %845 = vmatprep.subr.mxu0 0.0
    %846 = vmatpush1.msra.mxu0 0.0
    %847 = vmatprep.subr.mxu0 0.0
    %848 = vmatpush1.msra.mxu0 0.0
    %849 = vmatprep.subr.mxu0 0.0
    %850 = vmatpush1.msra.mxu0 0.0
    %851 = vmatprep.subr.mxu0 0.0
    %852 = vmatpush1.msra.mxu0 0.0
    %853 = vmatprep.subr.mxu0 0.0
    %854 = vmatpush1.msra.mxu0 0.0
    %855 = vmatprep.subr.mxu0 0.0
    %856 = vmatpush1.msra.mxu0 0.0
    %857 = vmatprep.subr.mxu0 0.0
    %858 = vmatpush1.msra.mxu0 0.0
    %859 = vmatprep.subr.mxu0 0.0
    %860 = vmatpush1.msra.mxu0 0.0
    %861 = vmatprep.subr.mxu0 0.0
    %862 = vmatpush1.msra.mxu0 0.0
    %863 = vmatprep.subr.mxu0 0.0
    %864 = vmatpush1.msra.mxu0 0.0
    %865 = vmatprep.subr.mxu0 0.0
    %866 = vmatpush1.msra.mxu0 0.0
    %867 = vmatprep.subr.mxu0 0.0
    %868 = vmatpush1.msra.mxu0 0.0
    %869 = vmatprep.subr.mxu0 0.0
    %870 = vmatpush1.msra.mxu0 0.0
    %871 = vmatprep.subr.mxu0 0.0
    %872 = vmatpush1.msra.mxu0 0.0
    %873 = vmatprep.subr.mxu0 0.0
    %874 = vmatpush1.msra.mxu0 0.0
    %875 = vmatprep.subr.mxu0 0.0
    %876 = vmatpush1.msra.mxu0 0.0
    %877 = vmatprep.subr.mxu0 0.0
    %878 = vmatpush1.msra.mxu0 0.0
    %879 = vmatprep.subr.mxu0 0.0
    %880 = vmatpush1.msra.mxu0 0.0
    %881 = vmatprep.subr.mxu0 0.0
    %882 = vmatpush1.msra.mxu0 0.0
    %883 = vmatprep.subr.mxu0 0.0
    %884 = vmatpush1.msra.mxu0 0.0
    %885 = vmatprep.subr.mxu0 0.0
    %886 = vmatpush1.msra.mxu0 0.0
    %887 = vmatprep.subr.mxu0 0.0
    %888 = vmatpush1.msra.mxu0 0.0
    %889 = vmatprep.subr.mxu0 0.0
    %890 = vmatpush1.msra.mxu0 0.0
    %891 = vmatprep.subr.mxu0 0.0
    %892 = vmatpush1.msra.mxu0 0.0
    %893 = vmatprep.subr.mxu0 0.0
    %894 = vmatpush1.msra.mxu0 0.0
    %895 = vmatprep.subr.mxu0 0.0
    %896 = vmatpush1.msra.mxu0 0.0
    %897 = vmatprep.subr.mxu0 0.0
    %898 = vmatpush1.msra.mxu0 0.0
    %899 = vmatprep.subr.mxu0 0.0
    %900 = vmatpush1.msra.mxu0 0.0
    %901 = vmatprep.subr.mxu0 0.0
    %902 = vmatpush1.msra.mxu0 0.0
    %903 = vmatprep.subr.mxu0 0.0
    %904 = vmatpush1.msra.mxu0 0.0
    %905 = vmatprep.mubr.f32.mxu0 0.0
    %906 = vmatmul.mubr.f32.gmra.mrb[0].mxu0 %v839
    %v907 = vpop.f32.mrb[0].mxu0
    %v908 = vadd.f32 0.0, %v907
    %v909 = vpop.f32.mrb[0].mxu0
    %910 = vdwg.mxu0
    %912 = vrot.lane.b32.xlu0 %v908, 24
    %v913 = vpop.permute.xlu0 %912
    %vm915 = vcmask 261312
    %916 = vst.msk [vmem:[#allocation2] sm:$0xff] %vm915, %v913
    %v917 = vld [vmem:[#allocation2] sm:$0xff]
    %v919 = vlaneseq
    %v920 = vshrl.u32 %v919, 7
    %v921 = vsub.s32 0, %v920
    %v922 = vrot.slane %v103, %v921
    %v925 = vsel %vm165, %v917, 0
    %927 = vmatprep.subr.mxu0 0.0
    %928 = vmatpush1.msra.mxu0 %v99
    %929 = vmatprep.subr.mxu0 0.0
    %930 = vmatpush1.msra.mxu0 %v100
    %931 = vmatprep.subr.mxu0 0.0
    %932 = vmatpush1.msra.mxu0 %v101
    %933 = vmatprep.subr.mxu0 0.0
    %934 = vmatpush1.msra.mxu0 %v102
    %935 = vmatprep.subr.mxu0 0.0
    %936 = vmatpush1.msra.mxu0 0.0
    %937 = vmatprep.subr.mxu0 0.0
    %938 = vmatpush1.msra.mxu0 0.0
    %939 = vmatprep.subr.mxu0 0.0
    %940 = vmatpush1.msra.mxu0 0.0
    %941 = vmatprep.subr.mxu0 0.0
    %942 = vmatpush1.msra.mxu0 0.0
    %943 = vmatprep.subr.mxu0 0.0
    %944 = vmatpush1.msra.mxu0 0.0
    %945 = vmatprep.subr.mxu0 0.0
    %946 = vmatpush1.msra.mxu0 0.0
    %947 = vmatprep.subr.mxu0 0.0
    %948 = vmatpush1.msra.mxu0 0.0
    %949 = vmatprep.subr.mxu0 0.0
    %950 = vmatpush1.msra.mxu0 0.0
    %951 = vmatprep.subr.mxu0 0.0
    %952 = vmatpush1.msra.mxu0 0.0
    %953 = vmatprep.subr.mxu0 0.0
    %954 = vmatpush1.msra.mxu0 0.0
    %955 = vmatprep.subr.mxu0 0.0
    %956 = vmatpush1.msra.mxu0 0.0
    %957 = vmatprep.subr.mxu0 0.0
    %958 = vmatpush1.msra.mxu0 0.0
    %959 = vmatprep.subr.mxu0 0.0
    %960 = vmatpush1.msra.mxu0 0.0
    %961 = vmatprep.subr.mxu0 0.0
    %962 = vmatpush1.msra.mxu0 0.0
    %963 = vmatprep.subr.mxu0 0.0
    %964 = vmatpush1.msra.mxu0 0.0
    %965 = vmatprep.subr.mxu0 0.0
    %966 = vmatpush1.msra.mxu0 0.0
    %967 = vmatprep.subr.mxu0 0.0
    %968 = vmatpush1.msra.mxu0 0.0
    %969 = vmatprep.subr.mxu0 0.0
    %970 = vmatpush1.msra.mxu0 0.0
    %971 = vmatprep.subr.mxu0 0.0
    %972 = vmatpush1.msra.mxu0 0.0
    %973 = vmatprep.subr.mxu0 0.0
    %974 = vmatpush1.msra.mxu0 0.0
    %975 = vmatprep.subr.mxu0 0.0
    %976 = vmatpush1.msra.mxu0 0.0
    %977 = vmatprep.subr.mxu0 0.0
    %978 = vmatpush1.msra.mxu0 0.0
    %979 = vmatprep.subr.mxu0 0.0
    %980 = vmatpush1.msra.mxu0 0.0
    %981 = vmatprep.subr.mxu0 0.0
    %982 = vmatpush1.msra.mxu0 0.0
    %983 = vmatprep.subr.mxu0 0.0
    %984 = vmatpush1.msra.mxu0 0.0
    %985 = vmatprep.subr.mxu0 0.0
    %986 = vmatpush1.msra.mxu0 0.0
    %987 = vmatprep.subr.mxu0 0.0
    %988 = vmatpush1.msra.mxu0 0.0
    %989 = vmatprep.subr.mxu0 0.0
    %990 = vmatpush1.msra.mxu0 0.0
    %991 = vmatprep.mubr.f32.mxu0 0.0
    %992 = vmatmul.mubr.f32.gmra.mrb[0].mxu0 %v925
    %v993 = vpop.f32.mrb[0].mxu0
    %v994 = vadd.f32 %v922, %v993
    %v995 = vpop.f32.mrb[0].mxu0
    %996 = vdwg.mxu0
    %v998 = vadd.f32 %v994, %v164
    %v999 = vsel %vm165, %v998, 0.0
    %v1000 = vrot.slane %v999, 4
    %v1001 = vadd.f32 %v999, %v1000
    %v1002 = vrot.slane %v1001, 2
    %v1003 = vadd.f32 %v1001, %v1002
    %v1004 = vrot.slane %v1003, 1
    %v1005 = vadd.f32 %v1003, %v1004
    %v1006 = vrcp.pop 8.0
    %v1007 = vmul.f32 %v1005, %v1006
    %v1008 = vsub.f32 %v998, %v1007
    %v1009 = vmul.f32 %v1008, %v1008
    %v1010 = vsel %vm165, %v1009, 0.0
    %v1011 = vrot.slane %v1010, 4
    %v1012 = vadd.f32 %v1010, %v1011
    %v1013 = vrot.slane %v1012, 2
    %v1014 = vadd.f32 %v1012, %v1013
    %v1015 = vrot.slane %v1014, 1
    %v1016 = vadd.f32 %v1014, %v1015
    %v1017 = vmul.f32 %v1016, %v1006
    %v1018 = vadd.f32 %v1017, 1e-05
    %v1019 = vrsqrt.pop %v1018
    %v1020 = vmul.f32 %v1008, %v1019
    %v1022 = vlaneseq
    %v1023 = vshrl.u32 %v1022, 7
    %v1024 = vsub.s32 0, %v1023
    %v1025 = vrot.slane %v104, %v1024
    %v1027 = vmul.f32 %v1020, %v1025
    %v1029 = vlaneseq
    %v1030 = vshrl.u32 %v1029, 7
    %v1031 = vsub.s32 0, %v1030
    %v1032 = vrot.slane %v105, %v1031
    %v1034 = vadd.f32 %v1027, %v1032
    %v1036 = vlaneseq
    %v1037 = vshrl.u32 %v1036, 7
    %v1038 = vsub.s32 0, %v1037
    %v1039 = vrot.slane %v110, %v1038
    %v1042 = vsel %vm165, %v1034, 0
    %1044 = vmatprep.subr.mxu0 0.0
    %1045 = vmatpush1.msra.mxu0 %v106
    %1046 = vmatprep.subr.mxu0 0.0
    %1047 = vmatpush1.msra.mxu0 %v107
    %1048 = vmatprep.subr.mxu0 0.0
    %1049 = vmatpush1.msra.mxu0 %v108
    %1050 = vmatprep.subr.mxu0 0.0
    %1051 = vmatpush1.msra.mxu0 %v109
    %1052 = vmatprep.subr.mxu0 0.0
    %1053 = vmatpush1.msra.mxu0 0.0
    %1054 = vmatprep.subr.mxu0 0.0
    %1055 = vmatpush1.msra.mxu0 0.0
    %1056 = vmatprep.subr.mxu0 0.0
    %1057 = vmatpush1.msra.mxu0 0.0
    %1058 = vmatprep.subr.mxu0 0.0
    %1059 = vmatpush1.msra.mxu0 0.0
    %1060 = vmatprep.subr.mxu0 0.0
    %1061 = vmatpush1.msra.mxu0 0.0
    %1062 = vmatprep.subr.mxu0 0.0
    %1063 = vmatpush1.msra.mxu0 0.0
    %1064 = vmatprep.subr.mxu0 0.0
    %1065 = vmatpush1.msra.mxu0 0.0
    %1066 = vmatprep.subr.mxu0 0.0
    %1067 = vmatpush1.msra.mxu0 0.0
    %1068 = vmatprep.subr.mxu0 0.0
    %1069 = vmatpush1.msra.mxu0 0.0
    %1070 = vmatprep.subr.mxu0 0.0
    %1071 = vmatpush1.msra.mxu0 0.0
    %1072 = vmatprep.subr.mxu0 0.0
    %1073 = vmatpush1.msra.mxu0 0.0
    %1074 = vmatprep.subr.mxu0 0.0
    %1075 = vmatpush1.msra.mxu0 0.0
    %1076 = vmatprep.subr.mxu0 0.0
    %1077 = vmatpush1.msra.mxu0 0.0
    %1078 = vmatprep.subr.mxu0 0.0
    %1079 = vmatpush1.msra.mxu0 0.0
    %1080 = vmatprep.subr.mxu0 0.0
    %1081 = vmatpush1.msra.mxu0 0.0
    %1082 = vmatprep.subr.mxu0 0.0
    %1083 = vmatpush1.msra.mxu0 0.0
    %1084 = vmatprep.subr.mxu0 0.0
    %1085 = vmatpush1.msra.mxu0 0.0
    %1086 = vmatprep.subr.mxu0 0.0
    %1087 = vmatpush1.msra.mxu0 0.0
    %1088 = vmatprep.subr.mxu0 0.0
    %1089 = vmatpush1.msra.mxu0 0.0
    %1090 = vmatprep.subr.mxu0 0.0
    %1091 = vmatpush1.msra.mxu0 0.0
    %1092 = vmatprep.subr.mxu0 0.0
    %1093 = vmatpush1.msra.mxu0 0.0
    %1094 = vmatprep.subr.mxu0 0.0
    %1095 = vmatpush1.msra.mxu0 0.0
    %1096 = vmatprep.subr.mxu0 0.0
    %1097 = vmatpush1.msra.mxu0 0.0
    %1098 = vmatprep.subr.mxu0 0.0
    %1099 = vmatpush1.msra.mxu0 0.0
    %1100 = vmatprep.subr.mxu0 0.0
    %1101 = vmatpush1.msra.mxu0 0.0
    %1102 = vmatprep.subr.mxu0 0.0
    %1103 = vmatpush1.msra.mxu0 0.0
    %1104 = vmatprep.subr.mxu0 0.0
    %1105 = vmatpush1.msra.mxu0 0.0
    %1106 = vmatprep.subr.mxu0 0.0
    %1107 = vmatpush1.msra.mxu0 0.0
    %1108 = vmatprep.mubr.f32.mxu0 0.0
    %1109 = vmatmul.mubr.f32.gmra.mrb[0].mxu0 %v1042
    %v1110 = vpop.f32.mrb[0].mxu0
    %v1111 = vadd.f32 %v1039, %v1110
    %v1112 = vpop.f32.mrb[0].mxu0
    %1113 = vdwg.mxu0
    %v1114 = vmax.f32 %v1111, 0.0
    %v1116 = vlaneseq
    %v1117 = vshrl.u32 %v1116, 7
    %v1118 = vsub.s32 0, %v1117
    %v1119 = vrot.slane %v119, %v1118
    %vm1121 = vcmask 523264
    %v1123 = vsel %vm1121, %v1114, 0
    %1125 = vmatprep.subr.mxu0 0.0
    %1126 = vmatpush1.msra.mxu0 %v111
    %1127 = vmatprep.subr.mxu0 0.0
    %1128 = vmatpush1.msra.mxu0 %v112
    %1129 = vmatprep.subr.mxu0 0.0
    %1130 = vmatpush1.msra.mxu0 %v113
    %1131 = vmatprep.subr.mxu0 0.0
    %1132 = vmatpush1.msra.mxu0 %v114
    %1133 = vmatprep.subr.mxu0 0.0
    %1134 = vmatpush1.msra.mxu0 %v115
    %1135 = vmatprep.subr.mxu0 0.0
    %1136 = vmatpush1.msra.mxu0 %v116
    %1137 = vmatprep.subr.mxu0 0.0
    %1138 = vmatpush1.msra.mxu0 %v117
    %1139 = vmatprep.subr.mxu0 0.0
    %1140 = vmatpush1.msra.mxu0 %v118
    %1141 = vmatprep.subr.mxu0 0.0
    %1142 = vmatpush1.msra.mxu0 0.0
    %1143 = vmatprep.subr.mxu0 0.0
    %1144 = vmatpush1.msra.mxu0 0.0
    %1145 = vmatprep.subr.mxu0 0.0
    %1146 = vmatpush1.msra.mxu0 0.0
    %1147 = vmatprep.subr.mxu0 0.0
    %1148 = vmatpush1.msra.mxu0 0.0
    %1149 = vmatprep.subr.mxu0 0.0
    %1150 = vmatpush1.msra.mxu0 0.0
    %1151 = vmatprep.subr.mxu0 0.0
    %1152 = vmatpush1.msra.mxu0 0.0
    %1153 = vmatprep.subr.mxu0 0.0
    %1154 = vmatpush1.msra.mxu0 0.0
    %1155 = vmatprep.subr.mxu0 0.0
    %1156 = vmatpush1.msra.mxu0 0.0
    %1157 = vmatprep.subr.mxu0 0.0
    %1158 = vmatpush1.msra.mxu0 0.0
    %1159 = vmatprep.subr.mxu0 0.0
    %1160 = vmatpush1.msra.mxu0 0.0
    %1161 = vmatprep.subr.mxu0 0.0
    %1162 = vmatpush1.msra.mxu0 0.0
    %1163 = vmatprep.subr.mxu0 0.0
    %1164 = vmatpush1.msra.mxu0 0.0
    %1165 = vmatprep.subr.mxu0 0.0
    %1166 = vmatpush1.msra.mxu0 0.0
    %1167 = vmatprep.subr.mxu0 0.0
    %1168 = vmatpush1.msra.mxu0 0.0
    %1169 = vmatprep.subr.mxu0 0.0
    %1170 = vmatpush1.msra.mxu0 0.0
    %1171 = vmatprep.subr.mxu0 0.0
    %1172 = vmatpush1.msra.mxu0 0.0
    %1173 = vmatprep.subr.mxu0 0.0
    %1174 = vmatpush1.msra.mxu0 0.0
    %1175 = vmatprep.subr.mxu0 0.0
    %1176 = vmatpush1.msra.mxu0 0.0
    %1177 = vmatprep.subr.mxu0 0.0
    %1178 = vmatpush1.msra.mxu0 0.0
    %1179 = vmatprep.subr.mxu0 0.0
    %1180 = vmatpush1.msra.mxu0 0.0
    %1181 = vmatprep.subr.mxu0 0.0
    %1182 = vmatpush1.msra.mxu0 0.0
    %1183 = vmatprep.subr.mxu0 0.0
    %1184 = vmatpush1.msra.mxu0 0.0
    %1185 = vmatprep.subr.mxu0 0.0
    %1186 = vmatpush1.msra.mxu0 0.0
    %1187 = vmatprep.subr.mxu0 0.0
    %1188 = vmatpush1.msra.mxu0 0.0
    %1189 = vmatprep.mubr.f32.mxu0 0.0
    %1190 = vmatmul.mubr.f32.gmra.mrb[0].mxu0 %v1123
    %v1191 = vpop.f32.mrb[0].mxu0
    %v1192 = vadd.f32 %v1119, %v1191
    %v1193 = vpop.f32.mrb[0].mxu0
    %1194 = vdwg.mxu0
    %v1195 = vadd.f32 %v1192, %v1034
    %v1196 = vsel %vm165, %v1195, 0.0
    %v1197 = vrot.slane %v1196, 4
    %v1198 = vadd.f32 %v1196, %v1197
    %v1199 = vrot.slane %v1198, 2
    %v1200 = vadd.f32 %v1198, %v1199
    %v1201 = vrot.slane %v1200, 1
    %v1202 = vadd.f32 %v1200, %v1201
    %v1203 = vmul.f32 %v1202, %v1006
    %v1204 = vsub.f32 %v1195, %v1203
    %v1205 = vmul.f32 %v1204, %v1204
    %v1206 = vsel %vm165, %v1205, 0.0
    %v1207 = vrot.slane %v1206, 4
    %v1208 = vadd.f32 %v1206, %v1207
    %v1209 = vrot.slane %v1208, 2
    %v1210 = vadd.f32 %v1208, %v1209
    %v1211 = vrot.slane %v1210, 1
    %v1212 = vadd.f32 %v1210, %v1211
    %v1213 = vmul.f32 %v1212, %v1006
    %v1214 = vadd.f32 %v1213, 1e-05
    %v1215 = vrsqrt.pop %v1214
    %v1216 = vmul.f32 %v1204, %v1215
    %v1218 = vlaneseq
    %v1219 = vshrl.u32 %v1218, 7
    %v1220 = vsub.s32 0, %v1219
    %v1221 = vrot.slane %v120, %v1220
    %v1223 = vmul.f32 %v1216, %v1221
    %v1225 = vlaneseq
    %v1226 = vshrl.u32 %v1225, 7
    %v1227 = vsub.s32 0, %v1226
    %v1228 = vrot.slane %v121, %v1227
    %v1230 = vadd.f32 %v1223, %v1228
    %v1232 = vcombine.high %v1230, %v1230
    %v1234 = vunpack.c.l.s4 1966171168
    %v1235 = vunpack.c.0.s8 %v1234
    %v1236 = vlaneseq
    %v1237 = vshrl.u32 %v1236, 7
    %v1238 = vsub.s32 %v1235, %v1237
    %v1239 = vrot.slane %v1230, %v1238
    %v1241 = vunpack.c.l.s4 1966171168
    %v1242 = vunpack.c.0.s8 %v1241
    %v1243 = vlaneseq
    %v1244 = vshrl.u32 %v1243, 7
    %v1245 = vsub.s32 %v1242, %v1244
    %v1246 = vrot.slane %v1232, %v1245
    %v1247 = vcombine.high %v1239, %v1239
    %v1248 = vcombine.high %v1246, %v1246
    %v1250 = vunpack.c.l.s4 1966171168
    %v1251 = vunpack.c.0.s8 %v1250
    %v1252 = vlaneseq
    %v1253 = vshrl.u32 %v1252, 7
    %v1254 = vsub.s32 %v1251, %v1253
    %v1255 = vrot.slane %v1239, %v1254
    %v1257 = vunpack.c.l.s4 1966171168
    %v1258 = vunpack.c.0.s8 %v1257
    %v1259 = vlaneseq
    %v1260 = vshrl.u32 %v1259, 7
    %v1261 = vsub.s32 %v1258, %v1260
    %v1262 = vrot.slane %v1246, %v1261
    %v1264 = vunpack.c.l.s4 1966171168
    %v1265 = vunpack.c.0.s8 %v1264
    %v1266 = vlaneseq
    %v1267 = vshrl.u32 %v1266, 7
    %v1268 = vsub.s32 %v1265, %v1267
    %v1269 = vrot.slane %v1247, %v1268
    %v1271 = vunpack.c.l.s4 1966171168
    %v1272 = vunpack.c.0.s8 %v1271
    %v1273 = vlaneseq
    %v1274 = vshrl.u32 %v1273, 7
    %v1275 = vsub.s32 %v1272, %v1274
    %v1276 = vrot.slane %v1248, %v1275
    %v1277 = vcombine.high %v1255, %v1255
    %v1278 = vcombine.high %v1262, %v1262
    %v1279 = vcombine.high %v1269, %v1269
    %v1280 = vcombine.high %v1276, %v1276
    %vm1289 = vcmask 253952
    %1290 = vst.msk [vmem:[#allocation11] sm:$0x1] %vm1289, %v1255
    %1291 = vst.msk [vmem:[#allocation11 + $0x2] sm:$0x1] %vm1289, %v1269
    %1292 = vst.msk [vmem:[#allocation11 + $0x4] sm:$0x1] %vm1289, %v1277
    %1293 = vst.msk [vmem:[#allocation11 + $0x6] sm:$0x1] %vm1289, %v1279
    %1294 = vst.msk [vmem:[#allocation11 + $0x8] sm:$0x1] %vm1289, %v1262
    %1295 = vst.msk [vmem:[#allocation11 + $0xa] sm:$0x1] %vm1289, %v1276
    %1296 = vst.msk [vmem:[#allocation11 + $0xc] sm:$0x1] %vm1289, %v1278
    %1297 = vst.msk [vmem:[#allocation11 + $0xe] sm:$0x1] %vm1289, %v1280
    %v1298 = vld [vmem:[#allocation3 + $0x1] sm:$0x1]
    %v1299 = vld [vmem:[#allocation3 + $0x3] sm:$0x1]
    %v1300 = vld [vmem:[#allocation3 + $0x5] sm:$0x1]
    %v1301 = vld [vmem:[#allocation3 + $0x7] sm:$0x1]
    %v1302 = vld [vmem:[#allocation3 + $0x9] sm:$0x1]
    %v1303 = vld [vmem:[#allocation3 + $0xb] sm:$0x1]
    %v1304 = vld [vmem:[#allocation3 + $0xd] sm:$0x1]
    %v1305 = vld [vmem:[#allocation3 + $0xf] sm:$0x1]
    %v1314 = vrot.slane %v1299, 7
    %v1315 = vsel %vm145, %v1314, %v1298
    %v1316 = vrot.slane %v1300, 6
    %v1317 = vsel %vm148, %v1316, %v1315
    %v1318 = vrot.slane %v1301, 5
    %v1319 = vsel %vm151, %v1318, %v1317
    %v1320 = vrot.slane %v1302, 4
    %v1321 = vsel %vm154, %v1320, %v1319
    %v1322 = vrot.slane %v1303, 3
    %v1323 = vsel %vm157, %v1322, %v1321
    %v1324 = vrot.slane %v1304, 2
    %v1325 = vsel %vm160, %v1324, %v1323
    %v1326 = vrot.slane %v1305, 1
    %v1327 = vsel %vm163, %v1326, %v1325
    %v1328 = vsel %vm165, %v1327, 0
    %1330 = vmatprep.subr.mxu0 0.0
    %1331 = vmatpush1.msra.mxu0 %v94
    %1332 = vmatprep.subr.mxu0 0.0
    %1333 = vmatpush1.msra.mxu0 %v95
    %1334 = vmatprep.subr.mxu0 0.0
    %1335 = vmatpush1.msra.mxu0 %v96
    %1336 = vmatprep.subr.mxu0 0.0
    %1337 = vmatpush1.msra.mxu0 %v97
    %1338 = vmatprep.subr.mxu0 0.0
    %1339 = vmatpush1.msra.mxu0 0.0
    %1340 = vmatprep.subr.mxu0 0.0
    %1341 = vmatpush1.msra.mxu0 0.0
    %1342 = vmatprep.subr.mxu0 0.0
    %1343 = vmatpush1.msra.mxu0 0.0
    %1344 = vmatprep.subr.mxu0 0.0
    %1345 = vmatpush1.msra.mxu0 0.0
    %1346 = vmatprep.subr.mxu0 0.0
    %1347 = vmatpush1.msra.mxu0 0.0
    %1348 = vmatprep.subr.mxu0 0.0
    %1349 = vmatpush1.msra.mxu0 0.0
    %1350 = vmatprep.subr.mxu0 0.0
    %1351 = vmatpush1.msra.mxu0 0.0
    %1352 = vmatprep.subr.mxu0 0.0
    %1353 = vmatpush1.msra.mxu0 0.0
    %1354 = vmatprep.subr.mxu0 0.0
    %1355 = vmatpush1.msra.mxu0 0.0
    %1356 = vmatprep.subr.mxu0 0.0
    %1357 = vmatpush1.msra.mxu0 0.0
    %1358 = vmatprep.subr.mxu0 0.0
    %1359 = vmatpush1.msra.mxu0 0.0
    %1360 = vmatprep.subr.mxu0 0.0
    %1361 = vmatpush1.msra.mxu0 0.0
    %1362 = vmatprep.subr.mxu0 0.0
    %1363 = vmatpush1.msra.mxu0 0.0
    %1364 = vmatprep.subr.mxu0 0.0
    %1365 = vmatpush1.msra.mxu0 0.0
    %1366 = vmatprep.subr.mxu0 0.0
    %1367 = vmatpush1.msra.mxu0 0.0
    %1368 = vmatprep.subr.mxu0 0.0
    %1369 = vmatpush1.msra.mxu0 0.0
    %1370 = vmatprep.subr.mxu0 0.0
    %1371 = vmatpush1.msra.mxu0 0.0
    %1372 = vmatprep.subr.mxu0 0.0
    %1373 = vmatpush1.msra.mxu0 0.0
    %1374 = vmatprep.subr.mxu0 0.0
    %1375 = vmatpush1.msra.mxu0 0.0
    %1376 = vmatprep.subr.mxu0 0.0
    %1377 = vmatpush1.msra.mxu0 0.0
    %1378 = vmatprep.subr.mxu0 0.0
    %1379 = vmatpush1.msra.mxu0 0.0
    %1380 = vmatprep.subr.mxu0 0.0
    %1381 = vmatpush1.msra.mxu0 0.0
    %1382 = vmatprep.subr.mxu0 0.0
    %1383 = vmatpush1.msra.mxu0 0.0
    %1384 = vmatprep.subr.mxu0 0.0
    %1385 = vmatpush1.msra.mxu0 0.0
    %1386 = vmatprep.subr.mxu0 0.0
    %1387 = vmatpush1.msra.mxu0 0.0
    %1388 = vmatprep.subr.mxu0 0.0
    %1389 = vmatpush1.msra.mxu0 0.0
    %1390 = vmatprep.subr.mxu0 0.0
    %1391 = vmatpush1.msra.mxu0 0.0
    %1392 = vmatprep.subr.mxu0 0.0
    %1393 = vmatpush1.msra.mxu0 0.0
    %1394 = vmatprep.mubr.f32.mxu0 0.0
    %1395 = vmatmul.mubr.f32.gmra.mrb[0].mxu0 %v1328
    %v1396 = vpop.f32.mrb[0].mxu0
    %v1397 = vadd.f32 %v134, %v1396
    %v1398 = vpop.f32.mrb[0].mxu0
    %1399 = vdwg.mxu0
    %1401 = vrot.lane.b32.xlu0 %v1397, 96
    %v1402 = vpop.permute.xlu0 %1401
    %v1403 = vsel %vm241, %v1397, 0
    %v1405 = vsel %vm241, %v1402, 0
    %1407 = vmatprep.subr.mxu0 0.0
    %1408 = vmatpush1.xpose.msra.mxu0 %v1405
    %1409 = vmatprep.subr.mxu0 0.0
    %1410 = vmatpush1.xpose.msra.mxu0 0.0
    %1411 = vmatprep.subr.mxu0 0.0
    %1412 = vmatpush1.xpose.msra.mxu0 0.0
    %1413 = vmatprep.subr.mxu0 0.0
    %1414 = vmatpush1.xpose.msra.mxu0 0.0
    %1415 = vmatprep.subr.mxu0 0.0
    %1416 = vmatpush1.xpose.msra.mxu0 0.0
    %1417 = vmatprep.subr.mxu0 0.0
    %1418 = vmatpush1.xpose.msra.mxu0 0.0
    %1419 = vmatprep.subr.mxu0 0.0
    %1420 = vmatpush1.xpose.msra.mxu0 0.0
    %1421 = vmatprep.subr.mxu0 0.0
    %1422 = vmatpush1.xpose.msra.mxu0 0.0
    %1423 = vmatprep.subr.mxu0 0.0
    %1424 = vmatpush1.xpose.msra.mxu0 0.0
    %1425 = vmatprep.subr.mxu0 0.0
    %1426 = vmatpush1.xpose.msra.mxu0 0.0
    %1427 = vmatprep.subr.mxu0 0.0
    %1428 = vmatpush1.xpose.msra.mxu0 0.0
    %1429 = vmatprep.subr.mxu0 0.0
    %1430 = vmatpush1.xpose.msra.mxu0 0.0
    %1431 = vmatprep.subr.mxu0 0.0
    %1432 = vmatpush1.xpose.msra.mxu0 0.0
    %1433 = vmatprep.subr.mxu0 0.0
    %1434 = vmatpush1.xpose.msra.mxu0 0.0
    %1435 = vmatprep.subr.mxu0 0.0
    %1436 = vmatpush1.xpose.msra.mxu0 0.0
    %1437 = vmatprep.subr.mxu0 0.0
    %1438 = vmatpush1.xpose.msra.mxu0 0.0
    %1439 = vmatprep.subr.mxu0 0.0
    %1440 = vmatpush1.xpose.msra.mxu0 0.0
    %1441 = vmatprep.subr.mxu0 0.0
    %1442 = vmatpush1.xpose.msra.mxu0 0.0
    %1443 = vmatprep.subr.mxu0 0.0
    %1444 = vmatpush1.xpose.msra.mxu0 0.0
    %1445 = vmatprep.subr.mxu0 0.0
    %1446 = vmatpush1.xpose.msra.mxu0 0.0
    %1447 = vmatprep.subr.mxu0 0.0
    %1448 = vmatpush1.xpose.msra.mxu0 0.0
    %1449 = vmatprep.subr.mxu0 0.0
    %1450 = vmatpush1.xpose.msra.mxu0 0.0
    %1451 = vmatprep.subr.mxu0 0.0
    %1452 = vmatpush1.xpose.msra.mxu0 0.0
    %1453 = vmatprep.subr.mxu0 0.0
    %1454 = vmatpush1.xpose.msra.mxu0 0.0
    %1455 = vmatprep.subr.mxu0 0.0
    %1456 = vmatpush1.xpose.msra.mxu0 0.0
    %1457 = vmatprep.subr.mxu0 0.0
    %1458 = vmatpush1.xpose.msra.mxu0 0.0
    %1459 = vmatprep.subr.mxu0 0.0
    %1460 = vmatpush1.xpose.msra.mxu0 0.0
    %1461 = vmatprep.subr.mxu0 0.0
    %1462 = vmatpush1.xpose.msra.mxu0 0.0
    %1463 = vmatprep.subr.mxu0 0.0
    %1464 = vmatpush1.xpose.msra.mxu0 0.0
    %1465 = vmatprep.subr.mxu0 0.0
    %1466 = vmatpush1.xpose.msra.mxu0 0.0
    %1467 = vmatprep.subr.mxu0 0.0
    %1468 = vmatpush1.xpose.msra.mxu0 0.0
    %1469 = vmatprep.subr.mxu0 0.0
    %1470 = vmatpush1.xpose.msra.mxu0 0.0
    %1471 = vmatprep.mubr.f32.mxu0 0.0
    %1472 = vmatmul.mubr.f32.gmra.mrb[0].mxu0 %v1403
    %v1473 = vpop.f32.mrb[0].mxu0
    %v1474 = vadd.f32 0.0, %v1473
    %v1475 = vpop.f32.mrb[0].mxu0
    %1476 = vdwg.mxu0
    %v1477 = vsel %vm241, %v1474, -inf
    %1478 = vmax.xlane.f32.xlu0 %v1477
    %v1479 = vpop.xlane.xlu0 %1478
    %v1480 = vsub.f32 %v1474, %v1479
    %v1481 = vmul.f32 %v1480, 1.442695
    %v1482 = vpow.pop %v1481
    %v1483 = vsel %vm241, %v1482, 0.0
    %1484 = vadd.xlane.f32.xlu0 %v1483
    %v1485 = vpop.xlane.xlu0 %1484
    %v1486 = vrcp.pop %v1485
    %v1487 = vmul.f32 %v1482, %v1486
    %1488 = vrot.lane.b32.xlu0 %v1397, 64
    %v1489 = vpop.permute.xlu0 %1488
    %v1492 = vsel %vm241, %v1487, 0
    %1494 = vmatprep.subr.mxu0 0.0
    %1495 = vmatpush1.msra.mxu0 %v1489
    %1496 = vmatprep.subr.mxu0 0.0
    %1497 = vmatpush1.msra.mxu0 0.0
    %1498 = vmatprep.subr.mxu0 0.0
    %1499 = vmatpush1.msra.mxu0 0.0
    %1500 = vmatprep.subr.mxu0 0.0
    %1501 = vmatpush1.msra.mxu0 0.0
    %1502 = vmatprep.subr.mxu0 0.0
    %1503 = vmatpush1.msra.mxu0 0.0
    %1504 = vmatprep.subr.mxu0 0.0
    %1505 = vmatpush1.msra.mxu0 0.0
    %1506 = vmatprep.subr.mxu0 0.0
    %1507 = vmatpush1.msra.mxu0 0.0
    %1508 = vmatprep.subr.mxu0 0.0
    %1509 = vmatpush1.msra.mxu0 0.0
    %1510 = vmatprep.subr.mxu0 0.0
    %1511 = vmatpush1.msra.mxu0 0.0
    %1512 = vmatprep.subr.mxu0 0.0
    %1513 = vmatpush1.msra.mxu0 0.0
    %1514 = vmatprep.subr.mxu0 0.0
    %1515 = vmatpush1.msra.mxu0 0.0
    %1516 = vmatprep.subr.mxu0 0.0
    %1517 = vmatpush1.msra.mxu0 0.0
    %1518 = vmatprep.subr.mxu0 0.0
    %1519 = vmatpush1.msra.mxu0 0.0
    %1520 = vmatprep.subr.mxu0 0.0
    %1521 = vmatpush1.msra.mxu0 0.0
    %1522 = vmatprep.subr.mxu0 0.0
    %1523 = vmatpush1.msra.mxu0 0.0
    %1524 = vmatprep.subr.mxu0 0.0
    %1525 = vmatpush1.msra.mxu0 0.0
    %1526 = vmatprep.subr.mxu0 0.0
    %1527 = vmatpush1.msra.mxu0 0.0
    %1528 = vmatprep.subr.mxu0 0.0
    %1529 = vmatpush1.msra.mxu0 0.0
    %1530 = vmatprep.subr.mxu0 0.0
    %1531 = vmatpush1.msra.mxu0 0.0
    %1532 = vmatprep.subr.mxu0 0.0
    %1533 = vmatpush1.msra.mxu0 0.0
    %1534 = vmatprep.subr.mxu0 0.0
    %1535 = vmatpush1.msra.mxu0 0.0
    %1536 = vmatprep.subr.mxu0 0.0
    %1537 = vmatpush1.msra.mxu0 0.0
    %1538 = vmatprep.subr.mxu0 0.0
    %1539 = vmatpush1.msra.mxu0 0.0
    %1540 = vmatprep.subr.mxu0 0.0
    %1541 = vmatpush1.msra.mxu0 0.0
    %1542 = vmatprep.subr.mxu0 0.0
    %1543 = vmatpush1.msra.mxu0 0.0
    %1544 = vmatprep.subr.mxu0 0.0
    %1545 = vmatpush1.msra.mxu0 0.0
    %1546 = vmatprep.subr.mxu0 0.0
    %1547 = vmatpush1.msra.mxu0 0.0
    %1548 = vmatprep.subr.mxu0 0.0
    %1549 = vmatpush1.msra.mxu0 0.0
    %1550 = vmatprep.subr.mxu0 0.0
    %1551 = vmatpush1.msra.mxu0 0.0
    %1552 = vmatprep.subr.mxu0 0.0
    %1553 = vmatpush1.msra.mxu0 0.0
    %1554 = vmatprep.subr.mxu0 0.0
    %1555 = vmatpush1.msra.mxu0 0.0
    %1556 = vmatprep.subr.mxu0 0.0
    %1557 = vmatpush1.msra.mxu0 0.0
    %1558 = vmatprep.mubr.f32.mxu0 0.0
    %1559 = vmatmul.mubr.f32.gmra.mrb[0].mxu0 %v1492
    %v1560 = vpop.f32.mrb[0].mxu0
    %v1561 = vadd.f32 0.0, %v1560
    %v1562 = vpop.f32.mrb[0].mxu0
    %1563 = vdwg.mxu0
    %1564 = vst.msk [vmem:[#allocation2] sm:$0xff] %vm241, %v1561
    %1565 = vrot.lane.b32.xlu0 %v1397, 120
    %v1566 = vpop.permute.xlu0 %1565
    %1567 = vrot.lane.b32.xlu0 %v1397, 88
    %v1568 = vpop.permute.xlu0 %1567
    %v1569 = vsel %vm241, %v1566, 0
    %v1571 = vsel %vm241, %v1568, 0
    %1573 = vmatprep.subr.mxu0 0.0
    %1574 = vmatpush1.xpose.msra.mxu0 %v1571
    %1575 = vmatprep.subr.mxu0 0.0
    %1576 = vmatpush1.xpose.msra.mxu0 0.0
    %1577 = vmatprep.subr.mxu0 0.0
    %1578 = vmatpush1.xpose.msra.mxu0 0.0
    %1579 = vmatprep.subr.mxu0 0.0
    %1580 = vmatpush1.xpose.msra.mxu0 0.0
    %1581 = vmatprep.subr.mxu0 0.0
    %1582 = vmatpush1.xpose.msra.mxu0 0.0
    %1583 = vmatprep.subr.mxu0 0.0
    %1584 = vmatpush1.xpose.msra.mxu0 0.0
    %1585 = vmatprep.subr.mxu0 0.0
    %1586 = vmatpush1.xpose.msra.mxu0 0.0
    %1587 = vmatprep.subr.mxu0 0.0
    %1588 = vmatpush1.xpose.msra.mxu0 0.0
    %1589 = vmatprep.subr.mxu0 0.0
    %1590 = vmatpush1.xpose.msra.mxu0 0.0
    %1591 = vmatprep.subr.mxu0 0.0
    %1592 = vmatpush1.xpose.msra.mxu0 0.0
    %1593 = vmatprep.subr.mxu0 0.0
    %1594 = vmatpush1.xpose.msra.mxu0 0.0
    %1595 = vmatprep.subr.mxu0 0.0
    %1596 = vmatpush1.xpose.msra.mxu0 0.0
    %1597 = vmatprep.subr.mxu0 0.0
    %1598 = vmatpush1.xpose.msra.mxu0 0.0
    %1599 = vmatprep.subr.mxu0 0.0
    %1600 = vmatpush1.xpose.msra.mxu0 0.0
    %1601 = vmatprep.subr.mxu0 0.0
    %1602 = vmatpush1.xpose.msra.mxu0 0.0
    %1603 = vmatprep.subr.mxu0 0.0
    %1604 = vmatpush1.xpose.msra.mxu0 0.0
    %1605 = vmatprep.subr.mxu0 0.0
    %1606 = vmatpush1.xpose.msra.mxu0 0.0
    %1607 = vmatprep.subr.mxu0 0.0
    %1608 = vmatpush1.xpose.msra.mxu0 0.0
    %1609 = vmatprep.subr.mxu0 0.0
    %1610 = vmatpush1.xpose.msra.mxu0 0.0
    %1611 = vmatprep.subr.mxu0 0.0
    %1612 = vmatpush1.xpose.msra.mxu0 0.0
    %1613 = vmatprep.subr.mxu0 0.0
    %1614 = vmatpush1.xpose.msra.mxu0 0.0
    %1615 = vmatprep.subr.mxu0 0.0
    %1616 = vmatpush1.xpose.msra.mxu0 0.0
    %1617 = vmatprep.subr.mxu0 0.0
    %1618 = vmatpush1.xpose.msra.mxu0 0.0
    %1619 = vmatprep.subr.mxu0 0.0
    %1620 = vmatpush1.xpose.msra.mxu0 0.0
    %1621 = vmatprep.subr.mxu0 0.0
    %1622 = vmatpush1.xpose.msra.mxu0 0.0
    %1623 = vmatprep.subr.mxu0 0.0
    %1624 = vmatpush1.xpose.msra.mxu0 0.0
    %1625 = vmatprep.subr.mxu0 0.0
    %1626 = vmatpush1.xpose.msra.mxu0 0.0
    %1627 = vmatprep.subr.mxu0 0.0
    %1628 = vmatpush1.xpose.msra.mxu0 0.0
    %1629 = vmatprep.subr.mxu0 0.0
    %1630 = vmatpush1.xpose.msra.mxu0 0.0
    %1631 = vmatprep.subr.mxu0 0.0
    %1632 = vmatpush1.xpose.msra.mxu0 0.0
    %1633 = vmatprep.subr.mxu0 0.0
    %1634 = vmatpush1.xpose.msra.mxu0 0.0
    %1635 = vmatprep.subr.mxu0 0.0
    %1636 = vmatpush1.xpose.msra.mxu0 0.0
    %1637 = vmatprep.mubr.f32.mxu0 0.0
    %1638 = vmatmul.mubr.f32.gmra.mrb[0].mxu0 %v1569
    %v1639 = vpop.f32.mrb[0].mxu0
    %v1640 = vadd.f32 0.0, %v1639
    %v1641 = vpop.f32.mrb[0].mxu0
    %1642 = vdwg.mxu0
    %v1643 = vsel %vm241, %v1640, -inf
    %1644 = vmax.xlane.f32.xlu0 %v1643
    %v1645 = vpop.xlane.xlu0 %1644
    %v1646 = vsub.f32 %v1640, %v1645
    %v1647 = vmul.f32 %v1646, 1.442695
    %v1648 = vpow.pop %v1647
    %v1649 = vsel %vm241, %v1648, 0.0
    %1650 = vadd.xlane.f32.xlu0 %v1649
    %v1651 = vpop.xlane.xlu0 %1650
    %v1652 = vrcp.pop %v1651
    %v1653 = vmul.f32 %v1648, %v1652
    %1654 = vrot.lane.b32.xlu0 %v1397, 56
    %v1655 = vpop.permute.xlu0 %1654
    %v1658 = vsel %vm241, %v1653, 0
    %1660 = vmatprep.subr.mxu0 0.0
    %1661 = vmatpush1.msra.mxu0 %v1655
    %1662 = vmatprep.subr.mxu0 0.0
    %1663 = vmatpush1.msra.mxu0 0.0
    %1664 = vmatprep.subr.mxu0 0.0
    %1665 = vmatpush1.msra.mxu0 0.0
    %1666 = vmatprep.subr.mxu0 0.0
    %1667 = vmatpush1.msra.mxu0 0.0
    %1668 = vmatprep.subr.mxu0 0.0
    %1669 = vmatpush1.msra.mxu0 0.0
    %1670 = vmatprep.subr.mxu0 0.0
    %1671 = vmatpush1.msra.mxu0 0.0
    %1672 = vmatprep.subr.mxu0 0.0
    %1673 = vmatpush1.msra.mxu0 0.0
    %1674 = vmatprep.subr.mxu0 0.0
    %1675 = vmatpush1.msra.mxu0 0.0
    %1676 = vmatprep.subr.mxu0 0.0
    %1677 = vmatpush1.msra.mxu0 0.0
    %1678 = vmatprep.subr.mxu0 0.0
    %1679 = vmatpush1.msra.mxu0 0.0
    %1680 = vmatprep.subr.mxu0 0.0
    %1681 = vmatpush1.msra.mxu0 0.0
    %1682 = vmatprep.subr.mxu0 0.0
    %1683 = vmatpush1.msra.mxu0 0.0
    %1684 = vmatprep.subr.mxu0 0.0
    %1685 = vmatpush1.msra.mxu0 0.0
    %1686 = vmatprep.subr.mxu0 0.0
    %1687 = vmatpush1.msra.mxu0 0.0
    %1688 = vmatprep.subr.mxu0 0.0
    %1689 = vmatpush1.msra.mxu0 0.0
    %1690 = vmatprep.subr.mxu0 0.0
    %1691 = vmatpush1.msra.mxu0 0.0
    %1692 = vmatprep.subr.mxu0 0.0
    %1693 = vmatpush1.msra.mxu0 0.0
    %1694 = vmatprep.subr.mxu0 0.0
    %1695 = vmatpush1.msra.mxu0 0.0
    %1696 = vmatprep.subr.mxu0 0.0
    %1697 = vmatpush1.msra.mxu0 0.0
    %1698 = vmatprep.subr.mxu0 0.0
    %1699 = vmatpush1.msra.mxu0 0.0
    %1700 = vmatprep.subr.mxu0 0.0
    %1701 = vmatpush1.msra.mxu0 0.0
    %1702 = vmatprep.subr.mxu0 0.0
    %1703 = vmatpush1.msra.mxu0 0.0
    %1704 = vmatprep.subr.mxu0 0.0
    %1705 = vmatpush1.msra.mxu0 0.0
    %1706 = vmatprep.subr.mxu0 0.0
    %1707 = vmatpush1.msra.mxu0 0.0
    %1708 = vmatprep.subr.mxu0 0.0
    %1709 = vmatpush1.msra.mxu0 0.0
    %1710 = vmatprep.subr.mxu0 0.0
    %1711 = vmatpush1.msra.mxu0 0.0
    %1712 = vmatprep.subr.mxu0 0.0
    %1713 = vmatpush1.msra.mxu0 0.0
    %1714 = vmatprep.subr.mxu0 0.0
    %1715 = vmatpush1.msra.mxu0 0.0
    %1716 = vmatprep.subr.mxu0 0.0
    %1717 = vmatpush1.msra.mxu0 0.0
    %1718 = vmatprep.subr.mxu0 0.0
    %1719 = vmatpush1.msra.mxu0 0.0
    %1720 = vmatprep.subr.mxu0 0.0
    %1721 = vmatpush1.msra.mxu0 0.0
    %1722 = vmatprep.subr.mxu0 0.0
    %1723 = vmatpush1.msra.mxu0 0.0
    %1724 = vmatprep.mubr.f32.mxu0 0.0
    %1725 = vmatmul.mubr.f32.gmra.mrb[0].mxu0 %v1658
    %v1726 = vpop.f32.mrb[0].mxu0
    %v1727 = vadd.f32 0.0, %v1726
    %v1728 = vpop.f32.mrb[0].mxu0
    %1729 = vdwg.mxu0
    %1731 = vrot.lane.b32.xlu0 %v1727, 8
    %v1732 = vpop.permute.xlu0 %1731
    %1734 = vst.msk [vmem:[#allocation2] sm:$0xff] %vm573, %v1732
    %1735 = vrot.lane.b32.xlu0 %v1397, 112
    %v1736 = vpop.permute.xlu0 %1735
    %1737 = vrot.lane.b32.xlu0 %v1397, 80
    %v1738 = vpop.permute.xlu0 %1737
    %v1739 = vsel %vm241, %v1736, 0
    %v1741 = vsel %vm241, %v1738, 0
    %1743 = vmatprep.subr.mxu0 0.0
    %1744 = vmatpush1.xpose.msra.mxu0 %v1741
    %1745 = vmatprep.subr.mxu0 0.0
    %1746 = vmatpush1.xpose.msra.mxu0 0.0
    %1747 = vmatprep.subr.mxu0 0.0
    %1748 = vmatpush1.xpose.msra.mxu0 0.0
    %1749 = vmatprep.subr.mxu0 0.0
    %1750 = vmatpush1.xpose.msra.mxu0 0.0
    %1751 = vmatprep.subr.mxu0 0.0
    %1752 = vmatpush1.xpose.msra.mxu0 0.0
    %1753 = vmatprep.subr.mxu0 0.0
    %1754 = vmatpush1.xpose.msra.mxu0 0.0
    %1755 = vmatprep.subr.mxu0 0.0
    %1756 = vmatpush1.xpose.msra.mxu0 0.0
    %1757 = vmatprep.subr.mxu0 0.0
    %1758 = vmatpush1.xpose.msra.mxu0 0.0
    %1759 = vmatprep.subr.mxu0 0.0
    %1760 = vmatpush1.xpose.msra.mxu0 0.0
    %1761 = vmatprep.subr.mxu0 0.0
    %1762 = vmatpush1.xpose.msra.mxu0 0.0
    %1763 = vmatprep.subr.mxu0 0.0
    %1764 = vmatpush1.xpose.msra.mxu0 0.0
    %1765 = vmatprep.subr.mxu0 0.0
    %1766 = vmatpush1.xpose.msra.mxu0 0.0
    %1767 = vmatprep.subr.mxu0 0.0
    %1768 = vmatpush1.xpose.msra.mxu0 0.0
    %1769 = vmatprep.subr.mxu0 0.0
    %1770 = vmatpush1.xpose.msra.mxu0 0.0
    %1771 = vmatprep.subr.mxu0 0.0
    %1772 = vmatpush1.xpose.msra.mxu0 0.0
    %1773 = vmatprep.subr.mxu0 0.0
    %1774 = vmatpush1.xpose.msra.mxu0 0.0
    %1775 = vmatprep.subr.mxu0 0.0
    %1776 = vmatpush1.xpose.msra.mxu0 0.0
    %1777 = vmatprep.subr.mxu0 0.0
    %1778 = vmatpush1.xpose.msra.mxu0 0.0
    %1779 = vmatprep.subr.mxu0 0.0
    %1780 = vmatpush1.xpose.msra.mxu0 0.0
    %1781 = vmatprep.subr.mxu0 0.0
    %1782 = vmatpush1.xpose.msra.mxu0 0.0
    %1783 = vmatprep.subr.mxu0 0.0
    %1784 = vmatpush1.xpose.msra.mxu0 0.0
    %1785 = vmatprep.subr.mxu0 0.0
    %1786 = vmatpush1.xpose.msra.mxu0 0.0
    %1787 = vmatprep.subr.mxu0 0.0
    %1788 = vmatpush1.xpose.msra.mxu0 0.0
    %1789 = vmatprep.subr.mxu0 0.0
    %1790 = vmatpush1.xpose.msra.mxu0 0.0
    %1791 = vmatprep.subr.mxu0 0.0
    %1792 = vmatpush1.xpose.msra.mxu0 0.0
    %1793 = vmatprep.subr.mxu0 0.0
    %1794 = vmatpush1.xpose.msra.mxu0 0.0
    %1795 = vmatprep.subr.mxu0 0.0
    %1796 = vmatpush1.xpose.msra.mxu0 0.0
    %1797 = vmatprep.subr.mxu0 0.0
    %1798 = vmatpush1.xpose.msra.mxu0 0.0
    %1799 = vmatprep.subr.mxu0 0.0
    %1800 = vmatpush1.xpose.msra.mxu0 0.0
    %1801 = vmatprep.subr.mxu0 0.0
    %1802 = vmatpush1.xpose.msra.mxu0 0.0
    %1803 = vmatprep.subr.mxu0 0.0
    %1804 = vmatpush1.xpose.msra.mxu0 0.0
    %1805 = vmatprep.subr.mxu0 0.0
    %1806 = vmatpush1.xpose.msra.mxu0 0.0
    %1807 = vmatprep.mubr.f32.mxu0 0.0
    %1808 = vmatmul.mubr.f32.gmra.mrb[0].mxu0 %v1739
    %v1809 = vpop.f32.mrb[0].mxu0
    %v1810 = vadd.f32 0.0, %v1809
    %v1811 = vpop.f32.mrb[0].mxu0
    %1812 = vdwg.mxu0
    %v1813 = vsel %vm241, %v1810, -inf
    %1814 = vmax.xlane.f32.xlu0 %v1813
    %v1815 = vpop.xlane.xlu0 %1814
    %v1816 = vsub.f32 %v1810, %v1815
    %v1817 = vmul.f32 %v1816, 1.442695
    %v1818 = vpow.pop %v1817
    %v1819 = vsel %vm241, %v1818, 0.0
    %1820 = vadd.xlane.f32.xlu0 %v1819
    %v1821 = vpop.xlane.xlu0 %1820
    %v1822 = vrcp.pop %v1821
    %v1823 = vmul.f32 %v1818, %v1822
    %1824 = vrot.lane.b32.xlu0 %v1397, 48
    %v1825 = vpop.permute.xlu0 %1824
    %v1828 = vsel %vm241, %v1823, 0
    %1830 = vmatprep.subr.mxu0 0.0
    %1831 = vmatpush1.msra.mxu0 %v1825
    %1832 = vmatprep.subr.mxu0 0.0
    %1833 = vmatpush1.msra.mxu0 0.0
    %1834 = vmatprep.subr.mxu0 0.0
    %1835 = vmatpush1.msra.mxu0 0.0
    %1836 = vmatprep.subr.mxu0 0.0
    %1837 = vmatpush1.msra.mxu0 0.0
    %1838 = vmatprep.subr.mxu0 0.0
    %1839 = vmatpush1.msra.mxu0 0.0
    %1840 = vmatprep.subr.mxu0 0.0
    %1841 = vmatpush1.msra.mxu0 0.0
    %1842 = vmatprep.subr.mxu0 0.0
    %1843 = vmatpush1.msra.mxu0 0.0
    %1844 = vmatprep.subr.mxu0 0.0
    %1845 = vmatpush1.msra.mxu0 0.0
    %1846 = vmatprep.subr.mxu0 0.0
    %1847 = vmatpush1.msra.mxu0 0.0
    %1848 = vmatprep.subr.mxu0 0.0
    %1849 = vmatpush1.msra.mxu0 0.0
    %1850 = vmatprep.subr.mxu0 0.0
    %1851 = vmatpush1.msra.mxu0 0.0
    %1852 = vmatprep.subr.mxu0 0.0
    %1853 = vmatpush1.msra.mxu0 0.0
    %1854 = vmatprep.subr.mxu0 0.0
    %1855 = vmatpush1.msra.mxu0 0.0
    %1856 = vmatprep.subr.mxu0 0.0
    %1857 = vmatpush1.msra.mxu0 0.0
    %1858 = vmatprep.subr.mxu0 0.0
    %1859 = vmatpush1.msra.mxu0 0.0
    %1860 = vmatprep.subr.mxu0 0.0
    %1861 = vmatpush1.msra.mxu0 0.0
    %1862 = vmatprep.subr.mxu0 0.0
    %1863 = vmatpush1.msra.mxu0 0.0
    %1864 = vmatprep.subr.mxu0 0.0
    %1865 = vmatpush1.msra.mxu0 0.0
    %1866 = vmatprep.subr.mxu0 0.0
    %1867 = vmatpush1.msra.mxu0 0.0
    %1868 = vmatprep.subr.mxu0 0.0
    %1869 = vmatpush1.msra.mxu0 0.0
    %1870 = vmatprep.subr.mxu0 0.0
    %1871 = vmatpush1.msra.mxu0 0.0
    %1872 = vmatprep.subr.mxu0 0.0
    %1873 = vmatpush1.msra.mxu0 0.0
    %1874 = vmatprep.subr.mxu0 0.0
    %1875 = vmatpush1.msra.mxu0 0.0
    %1876 = vmatprep.subr.mxu0 0.0
    %1877 = vmatpush1.msra.mxu0 0.0
    %1878 = vmatprep.subr.mxu0 0.0
    %1879 = vmatpush1.msra.mxu0 0.0
    %1880 = vmatprep.subr.mxu0 0.0
    %1881 = vmatpush1.msra.mxu0 0.0
    %1882 = vmatprep.subr.mxu0 0.0
    %1883 = vmatpush1.msra.mxu0 0.0
    %1884 = vmatprep.subr.mxu0 0.0
    %1885 = vmatpush1.msra.mxu0 0.0
    %1886 = vmatprep.subr.mxu0 0.0
    %1887 = vmatpush1.msra.mxu0 0.0
    %1888 = vmatprep.subr.mxu0 0.0
    %1889 = vmatpush1.msra.mxu0 0.0
    %1890 = vmatprep.subr.mxu0 0.0
    %1891 = vmatpush1.msra.mxu0 0.0
    %1892 = vmatprep.subr.mxu0 0.0
    %1893 = vmatpush1.msra.mxu0 0.0
    %1894 = vmatprep.mubr.f32.mxu0 0.0
    %1895 = vmatmul.mubr.f32.gmra.mrb[0].mxu0 %v1828
    %v1896 = vpop.f32.mrb[0].mxu0
    %v1897 = vadd.f32 0.0, %v1896
    %v1898 = vpop.f32.mrb[0].mxu0
    %1899 = vdwg.mxu0
    %1901 = vrot.lane.b32.xlu0 %v1897, 16
    %v1902 = vpop.permute.xlu0 %1901
    %1904 = vst.msk [vmem:[#allocation2] sm:$0xff] %vm744, %v1902
    %1905 = vrot.lane.b32.xlu0 %v1397, 104
    %v1906 = vpop.permute.xlu0 %1905
    %1907 = vrot.lane.b32.xlu0 %v1397, 72
    %v1908 = vpop.permute.xlu0 %1907
    %v1909 = vsel %vm241, %v1906, 0
    %v1911 = vsel %vm241, %v1908, 0
    %1913 = vmatprep.subr.mxu0 0.0
    %1914 = vmatpush1.xpose.msra.mxu0 %v1911
    %1915 = vmatprep.subr.mxu0 0.0
    %1916 = vmatpush1.xpose.msra.mxu0 0.0
    %1917 = vmatprep.subr.mxu0 0.0
    %1918 = vmatpush1.xpose.msra.mxu0 0.0
    %1919 = vmatprep.subr.mxu0 0.0
    %1920 = vmatpush1.xpose.msra.mxu0 0.0
    %1921 = vmatprep.subr.mxu0 0.0
    %1922 = vmatpush1.xpose.msra.mxu0 0.0
    %1923 = vmatprep.subr.mxu0 0.0
    %1924 = vmatpush1.xpose.msra.mxu0 0.0
    %1925 = vmatprep.subr.mxu0 0.0
    %1926 = vmatpush1.xpose.msra.mxu0 0.0
    %1927 = vmatprep.subr.mxu0 0.0
    %1928 = vmatpush1.xpose.msra.mxu0 0.0
    %1929 = vmatprep.subr.mxu0 0.0
    %1930 = vmatpush1.xpose.msra.mxu0 0.0
    %1931 = vmatprep.subr.mxu0 0.0
    %1932 = vmatpush1.xpose.msra.mxu0 0.0
    %1933 = vmatprep.subr.mxu0 0.0
    %1934 = vmatpush1.xpose.msra.mxu0 0.0
    %1935 = vmatprep.subr.mxu0 0.0
    %1936 = vmatpush1.xpose.msra.mxu0 0.0
    %1937 = vmatprep.subr.mxu0 0.0
    %1938 = vmatpush1.xpose.msra.mxu0 0.0
    %1939 = vmatprep.subr.mxu0 0.0
    %1940 = vmatpush1.xpose.msra.mxu0 0.0
    %1941 = vmatprep.subr.mxu0 0.0
    %1942 = vmatpush1.xpose.msra.mxu0 0.0
    %1943 = vmatprep.subr.mxu0 0.0
    %1944 = vmatpush1.xpose.msra.mxu0 0.0
    %1945 = vmatprep.subr.mxu0 0.0
    %1946 = vmatpush1.xpose.msra.mxu0 0.0
    %1947 = vmatprep.subr.mxu0 0.0
    %1948 = vmatpush1.xpose.msra.mxu0 0.0
    %1949 = vmatprep.subr.mxu0 0.0
    %1950 = vmatpush1.xpose.msra.mxu0 0.0
    %1951 = vmatprep.subr.mxu0 0.0
    %1952 = vmatpush1.xpose.msra.mxu0 0.0
    %1953 = vmatprep.subr.mxu0 0.0
    %1954 = vmatpush1.xpose.msra.mxu0 0.0
    %1955 = vmatprep.subr.mxu0 0.0
    %1956 = vmatpush1.xpose.msra.mxu0 0.0
    %1957 = vmatprep.subr.mxu0 0.0
    %1958 = vmatpush1.xpose.msra.mxu0 0.0
    %1959 = vmatprep.subr.mxu0 0.0
    %1960 = vmatpush1.xpose.msra.mxu0 0.0
    %1961 = vmatprep.subr.mxu0 0.0
    %1962 = vmatpush1.xpose.msra.mxu0 0.0
    %1963 = vmatprep.subr.mxu0 0.0
    %1964 = vmatpush1.xpose.msra.mxu0 0.0
    %1965 = vmatprep.subr.mxu0 0.0
    %1966 = vmatpush1.xpose.msra.mxu0 0.0
    %1967 = vmatprep.subr.mxu0 0.0
    %1968 = vmatpush1.xpose.msra.mxu0 0.0
    %1969 = vmatprep.subr.mxu0 0.0
    %1970 = vmatpush1.xpose.msra.mxu0 0.0
    %1971 = vmatprep.subr.mxu0 0.0
    %1972 = vmatpush1.xpose.msra.mxu0 0.0
    %1973 = vmatprep.subr.mxu0 0.0
    %1974 = vmatpush1.xpose.msra.mxu0 0.0
    %1975 = vmatprep.subr.mxu0 0.0
    %1976 = vmatpush1.xpose.msra.mxu0 0.0
    %1977 = vmatprep.mubr.f32.mxu0 0.0
    %1978 = vmatmul.mubr.f32.gmra.mrb[0].mxu0 %v1909
    %v1979 = vpop.f32.mrb[0].mxu0
    %v1980 = vadd.f32 0.0, %v1979
    %v1981 = vpop.f32.mrb[0].mxu0
    %1982 = vdwg.mxu0
    %v1983 = vsel %vm241, %v1980, -inf
    %1984 = vmax.xlane.f32.xlu0 %v1983
    %v1985 = vpop.xlane.xlu0 %1984
    %v1986 = vsub.f32 %v1980, %v1985
    %v1987 = vmul.f32 %v1986, 1.442695
    %v1988 = vpow.pop %v1987
    %v1989 = vsel %vm241, %v1988, 0.0
    %1990 = vadd.xlane.f32.xlu0 %v1989
    %v1991 = vpop.xlane.xlu0 %1990
    %v1992 = vrcp.pop %v1991
    %v1993 = vmul.f32 %v1988, %v1992
    %1994 = vrot.lane.b32.xlu0 %v1397, 40
    %v1995 = vpop.permute.xlu0 %1994
    %v1998 = vsel %vm241, %v1993, 0
    %2000 = vmatprep.subr.mxu0 0.0
    %2001 = vmatpush1.msra.mxu0 %v1995
    %2002 = vmatprep.subr.mxu0 0.0
    %2003 = vmatpush1.msra.mxu0 0.0
    %2004 = vmatprep.subr.mxu0 0.0
    %2005 = vmatpush1.msra.mxu0 0.0
    %2006 = vmatprep.subr.mxu0 0.0
    %2007 = vmatpush1.msra.mxu0 0.0
    %2008 = vmatprep.subr.mxu0 0.0
    %2009 = vmatpush1.msra.mxu0 0.0
    %2010 = vmatprep.subr.mxu0 0.0
    %2011 = vmatpush1.msra.mxu0 0.0
    %2012 = vmatprep.subr.mxu0 0.0
    %2013 = vmatpush1.msra.mxu0 0.0
    %2014 = vmatprep.subr.mxu0 0.0
    %2015 = vmatpush1.msra.mxu0 0.0
    %2016 = vmatprep.subr.mxu0 0.0
    %2017 = vmatpush1.msra.mxu0 0.0
    %2018 = vmatprep.subr.mxu0 0.0
    %2019 = vmatpush1.msra.mxu0 0.0
    %2020 = vmatprep.subr.mxu0 0.0
    %2021 = vmatpush1.msra.mxu0 0.0
    %2022 = vmatprep.subr.mxu0 0.0
    %2023 = vmatpush1.msra.mxu0 0.0
    %2024 = vmatprep.subr.mxu0 0.0
    %2025 = vmatpush1.msra.mxu0 0.0
    %2026 = vmatprep.subr.mxu0 0.0
    %2027 = vmatpush1.msra.mxu0 0.0
    %2028 = vmatprep.subr.mxu0 0.0
    %2029 = vmatpush1.msra.mxu0 0.0
    %2030 = vmatprep.subr.mxu0 0.0
    %2031 = vmatpush1.msra.mxu0 0.0
    %2032 = vmatprep.subr.mxu0 0.0
    %2033 = vmatpush1.msra.mxu0 0.0
    %2034 = vmatprep.subr.mxu0 0.0
    %2035 = vmatpush1.msra.mxu0 0.0
    %2036 = vmatprep.subr.mxu0 0.0
    %2037 = vmatpush1.msra.mxu0 0.0
    %2038 = vmatprep.subr.mxu0 0.0
    %2039 = vmatpush1.msra.mxu0 0.0
    %2040 = vmatprep.subr.mxu0 0.0
    %2041 = vmatpush1.msra.mxu0 0.0
    %2042 = vmatprep.subr.mxu0 0.0
    %2043 = vmatpush1.msra.mxu0 0.0
    %2044 = vmatprep.subr.mxu0 0.0
    %2045 = vmatpush1.msra.mxu0 0.0
    %2046 = vmatprep.subr.mxu0 0.0
    %2047 = vmatpush1.msra.mxu0 0.0
    %2048 = vmatprep.subr.mxu0 0.0
    %2049 = vmatpush1.msra.mxu0 0.0
    %2050 = vmatprep.subr.mxu0 0.0
    %2051 = vmatpush1.msra.mxu0 0.0
    %2052 = vmatprep.subr.mxu0 0.0
    %2053 = vmatpush1.msra.mxu0 0.0
    %2054 = vmatprep.subr.mxu0 0.0
    %2055 = vmatpush1.msra.mxu0 0.0
    %2056 = vmatprep.subr.mxu0 0.0
    %2057 = vmatpush1.msra.mxu0 0.0
    %2058 = vmatprep.subr.mxu0 0.0
    %2059 = vmatpush1.msra.mxu0 0.0
    %2060 = vmatprep.subr.mxu0 0.0
    %2061 = vmatpush1.msra.mxu0 0.0
    %2062 = vmatprep.subr.mxu0 0.0
    %2063 = vmatpush1.msra.mxu0 0.0
    %2064 = vmatprep.mubr.f32.mxu0 0.0
    %2065 = vmatmul.mubr.f32.gmra.mrb[0].mxu0 %v1998
    %v2066 = vpop.f32.mrb[0].mxu0
    %v2067 = vadd.f32 0.0, %v2066
    %v2068 = vpop.f32.mrb[0].mxu0
    %2069 = vdwg.mxu0
    %2071 = vrot.lane.b32.xlu0 %v2067, 24
    %v2072 = vpop.permute.xlu0 %2071
    %2074 = vst.msk [vmem:[#allocation2] sm:$0xff] %vm915, %v2072
    %v2075 = vld [vmem:[#allocation2] sm:$0xff]
    %v2077 = vsel %vm165, %v2075, 0
    %2079 = vmatprep.subr.mxu0 0.0
    %2080 = vmatpush1.msra.mxu0 %v99
    %2081 = vmatprep.subr.mxu0 0.0
    %2082 = vmatpush1.msra.mxu0 %v100
    %2083 = vmatprep.subr.mxu0 0.0
    %2084 = vmatpush1.msra.mxu0 %v101
    %2085 = vmatprep.subr.mxu0 0.0
    %2086 = vmatpush1.msra.mxu0 %v102
    %2087 = vmatprep.subr.mxu0 0.0
    %2088 = vmatpush1.msra.mxu0 0.0
    %2089 = vmatprep.subr.mxu0 0.0
    %2090 = vmatpush1.msra.mxu0 0.0
    %2091 = vmatprep.subr.mxu0 0.0
    %2092 = vmatpush1.msra.mxu0 0.0
    %2093 = vmatprep.subr.mxu0 0.0
    %2094 = vmatpush1.msra.mxu0 0.0
    %2095 = vmatprep.subr.mxu0 0.0
    %2096 = vmatpush1.msra.mxu0 0.0
    %2097 = vmatprep.subr.mxu0 0.0
    %2098 = vmatpush1.msra.mxu0 0.0
    %2099 = vmatprep.subr.mxu0 0.0
    %2100 = vmatpush1.msra.mxu0 0.0
    %2101 = vmatprep.subr.mxu0 0.0
    %2102 = vmatpush1.msra.mxu0 0.0
    %2103 = vmatprep.subr.mxu0 0.0
    %2104 = vmatpush1.msra.mxu0 0.0
    %2105 = vmatprep.subr.mxu0 0.0
    %2106 = vmatpush1.msra.mxu0 0.0
    %2107 = vmatprep.subr.mxu0 0.0
    %2108 = vmatpush1.msra.mxu0 0.0
    %2109 = vmatprep.subr.mxu0 0.0
    %2110 = vmatpush1.msra.mxu0 0.0
    %2111 = vmatprep.subr.mxu0 0.0
    %2112 = vmatpush1.msra.mxu0 0.0
    %2113 = vmatprep.subr.mxu0 0.0
    %2114 = vmatpush1.msra.mxu0 0.0
    %2115 = vmatprep.subr.mxu0 0.0
    %2116 = vmatpush1.msra.mxu0 0.0
    %2117 = vmatprep.subr.mxu0 0.0
    %2118 = vmatpush1.msra.mxu0 0.0
    %2119 = vmatprep.subr.mxu0 0.0
    %2120 = vmatpush1.msra.mxu0 0.0
    %2121 = vmatprep.subr.mxu0 0.0
    %2122 = vmatpush1.msra.mxu0 0.0
    %2123 = vmatprep.subr.mxu0 0.0
    %2124 = vmatpush1.msra.mxu0 0.0
    %2125 = vmatprep.subr.mxu0 0.0
    %2126 = vmatpush1.msra.mxu0 0.0
    %2127 = vmatprep.subr.mxu0 0.0
    %2128 = vmatpush1.msra.mxu0 0.0
    %2129 = vmatprep.subr.mxu0 0.0
    %2130 = vmatpush1.msra.mxu0 0.0
    %2131 = vmatprep.subr.mxu0 0.0
    %2132 = vmatpush1.msra.mxu0 0.0
    %2133 = vmatprep.subr.mxu0 0.0
    %2134 = vmatpush1.msra.mxu0 0.0
    %2135 = vmatprep.subr.mxu0 0.0
    %2136 = vmatpush1.msra.mxu0 0.0
    %2137 = vmatprep.subr.mxu0 0.0
    %2138 = vmatpush1.msra.mxu0 0.0
    %2139 = vmatprep.subr.mxu0 0.0
    %2140 = vmatpush1.msra.mxu0 0.0
    %2141 = vmatprep.subr.mxu0 0.0
    %2142 = vmatpush1.msra.mxu0 0.0
    %2143 = vmatprep.mubr.f32.mxu0 0.0
    %2144 = vmatmul.mubr.f32.gmra.mrb[0].mxu0 %v2077
    %v2145 = vpop.f32.mrb[0].mxu0
    %v2146 = vadd.f32 %v922, %v2145
    %v2147 = vpop.f32.mrb[0].mxu0
    %2148 = vdwg.mxu0
    %v2150 = vadd.f32 %v2146, %v1327
    %v2151 = vsel %vm165, %v2150, 0.0
    %v2152 = vrot.slane %v2151, 4
    %v2153 = vadd.f32 %v2151, %v2152
    %v2154 = vrot.slane %v2153, 2
    %v2155 = vadd.f32 %v2153, %v2154
    %v2156 = vrot.slane %v2155, 1
    %v2157 = vadd.f32 %v2155, %v2156
    %v2158 = vmul.f32 %v2157, %v1006
    %v2159 = vsub.f32 %v2150, %v2158
    %v2160 = vmul.f32 %v2159, %v2159
    %v2161 = vsel %vm165, %v2160, 0.0
    %v2162 = vrot.slane %v2161, 4
    %v2163 = vadd.f32 %v2161, %v2162
    %v2164 = vrot.slane %v2163, 2
    %v2165 = vadd.f32 %v2163, %v2164
    %v2166 = vrot.slane %v2165, 1
    %v2167 = vadd.f32 %v2165, %v2166
    %v2168 = vmul.f32 %v2167, %v1006
    %v2169 = vadd.f32 %v2168, 1e-05
    %v2170 = vrsqrt.pop %v2169
    %v2171 = vmul.f32 %v2159, %v2170
    %v2172 = vmul.f32 %v2171, %v1025
    %v2173 = vadd.f32 %v2172, %v1032
    %v2175 = vsel %vm165, %v2173, 0
    %2177 = vmatprep.subr.mxu0 0.0
    %2178 = vmatpush1.msra.mxu0 %v106
    %2179 = vmatprep.subr.mxu0 0.0
    %2180 = vmatpush1.msra.mxu0 %v107
    %2181 = vmatprep.subr.mxu0 0.0
    %2182 = vmatpush1.msra.mxu0 %v108
    %2183 = vmatprep.subr.mxu0 0.0
    %2184 = vmatpush1.msra.mxu0 %v109
    %2185 = vmatprep.subr.mxu0 0.0
    %2186 = vmatpush1.msra.mxu0 0.0
    %2187 = vmatprep.subr.mxu0 0.0
    %2188 = vmatpush1.msra.mxu0 0.0
    %2189 = vmatprep.subr.mxu0 0.0
    %2190 = vmatpush1.msra.mxu0 0.0
    %2191 = vmatprep.subr.mxu0 0.0
    %2192 = vmatpush1.msra.mxu0 0.0
    %2193 = vmatprep.subr.mxu0 0.0
    %2194 = vmatpush1.msra.mxu0 0.0
    %2195 = vmatprep.subr.mxu0 0.0
    %2196 = vmatpush1.msra.mxu0 0.0
    %2197 = vmatprep.subr.mxu0 0.0
    %2198 = vmatpush1.msra.mxu0 0.0
    %2199 = vmatprep.subr.mxu0 0.0
    %2200 = vmatpush1.msra.mxu0 0.0
    %2201 = vmatprep.subr.mxu0 0.0
    %2202 = vmatpush1.msra.mxu0 0.0
    %2203 = vmatprep.subr.mxu0 0.0
    %2204 = vmatpush1.msra.mxu0 0.0
    %2205 = vmatprep.subr.mxu0 0.0
    %2206 = vmatpush1.msra.mxu0 0.0
    %2207 = vmatprep.subr.mxu0 0.0
    %2208 = vmatpush1.msra.mxu0 0.0
    %2209 = vmatprep.subr.mxu0 0.0
    %2210 = vmatpush1.msra.mxu0 0.0
    %2211 = vmatprep.subr.mxu0 0.0
    %2212 = vmatpush1.msra.mxu0 0.0
    %2213 = vmatprep.subr.mxu0 0.0
    %2214 = vmatpush1.msra.mxu0 0.0
    %2215 = vmatprep.subr.mxu0 0.0
    %2216 = vmatpush1.msra.mxu0 0.0
    %2217 = vmatprep.subr.mxu0 0.0
    %2218 = vmatpush1.msra.mxu0 0.0
    %2219 = vmatprep.subr.mxu0 0.0
    %2220 = vmatpush1.msra.mxu0 0.0
    %2221 = vmatprep.subr.mxu0 0.0
    %2222 = vmatpush1.msra.mxu0 0.0
    %2223 = vmatprep.subr.mxu0 0.0
    %2224 = vmatpush1.msra.mxu0 0.0
    %2225 = vmatprep.subr.mxu0 0.0
    %2226 = vmatpush1.msra.mxu0 0.0
    %2227 = vmatprep.subr.mxu0 0.0
    %2228 = vmatpush1.msra.mxu0 0.0
    %2229 = vmatprep.subr.mxu0 0.0
    %2230 = vmatpush1.msra.mxu0 0.0
    %2231 = vmatprep.subr.mxu0 0.0
    %2232 = vmatpush1.msra.mxu0 0.0
    %2233 = vmatprep.subr.mxu0 0.0
    %2234 = vmatpush1.msra.mxu0 0.0
    %2235 = vmatprep.subr.mxu0 0.0
    %2236 = vmatpush1.msra.mxu0 0.0
    %2237 = vmatprep.subr.mxu0 0.0
    %2238 = vmatpush1.msra.mxu0 0.0
    %2239 = vmatprep.subr.mxu0 0.0
    %2240 = vmatpush1.msra.mxu0 0.0
    %2241 = vmatprep.mubr.f32.mxu0 0.0
    %2242 = vmatmul.mubr.f32.gmra.mrb[0].mxu0 %v2175
    %v2243 = vpop.f32.mrb[0].mxu0
    %v2244 = vadd.f32 %v1039, %v2243
    %v2245 = vpop.f32.mrb[0].mxu0
    %2246 = vdwg.mxu0
    %v2247 = vmax.f32 %v2244, 0.0
    %v2249 = vsel %vm1121, %v2247, 0
    %2251 = vmatprep.subr.mxu0 0.0
    %2252 = vmatpush1.msra.mxu0 %v111
    %2253 = vmatprep.subr.mxu0 0.0
    %2254 = vmatpush1.msra.mxu0 %v112
    %2255 = vmatprep.subr.mxu0 0.0
    %2256 = vmatpush1.msra.mxu0 %v113
    %2257 = vmatprep.subr.mxu0 0.0
    %2258 = vmatpush1.msra.mxu0 %v114
    %2259 = vmatprep.subr.mxu0 0.0
    %2260 = vmatpush1.msra.mxu0 %v115
    %2261 = vmatprep.subr.mxu0 0.0
    %2262 = vmatpush1.msra.mxu0 %v116
    %2263 = vmatprep.subr.mxu0 0.0
    %2264 = vmatpush1.msra.mxu0 %v117
    %2265 = vmatprep.subr.mxu0 0.0
    %2266 = vmatpush1.msra.mxu0 %v118
    %2267 = vmatprep.subr.mxu0 0.0
    %2268 = vmatpush1.msra.mxu0 0.0
    %2269 = vmatprep.subr.mxu0 0.0
    %2270 = vmatpush1.msra.mxu0 0.0
    %2271 = vmatprep.subr.mxu0 0.0
    %2272 = vmatpush1.msra.mxu0 0.0
    %2273 = vmatprep.subr.mxu0 0.0
    %2274 = vmatpush1.msra.mxu0 0.0
    %2275 = vmatprep.subr.mxu0 0.0
    %2276 = vmatpush1.msra.mxu0 0.0
    %2277 = vmatprep.subr.mxu0 0.0
    %2278 = vmatpush1.msra.mxu0 0.0
    %2279 = vmatprep.subr.mxu0 0.0
    %2280 = vmatpush1.msra.mxu0 0.0
    %2281 = vmatprep.subr.mxu0 0.0
    %2282 = vmatpush1.msra.mxu0 0.0
    %2283 = vmatprep.subr.mxu0 0.0
    %2284 = vmatpush1.msra.mxu0 0.0
    %2285 = vmatprep.subr.mxu0 0.0
    %2286 = vmatpush1.msra.mxu0 0.0
    %2287 = vmatprep.subr.mxu0 0.0
    %2288 = vmatpush1.msra.mxu0 0.0
    %2289 = vmatprep.subr.mxu0 0.0
    %2290 = vmatpush1.msra.mxu0 0.0
    %2291 = vmatprep.subr.mxu0 0.0
    %2292 = vmatpush1.msra.mxu0 0.0
    %2293 = vmatprep.subr.mxu0 0.0
    %2294 = vmatpush1.msra.mxu0 0.0
    %2295 = vmatprep.subr.mxu0 0.0
    %2296 = vmatpush1.msra.mxu0 0.0
    %2297 = vmatprep.subr.mxu0 0.0
    %2298 = vmatpush1.msra.mxu0 0.0
    %2299 = vmatprep.subr.mxu0 0.0
    %2300 = vmatpush1.msra.mxu0 0.0
    %2301 = vmatprep.subr.mxu0 0.0
    %2302 = vmatpush1.msra.mxu0 0.0
    %2303 = vmatprep.subr.mxu0 0.0
    %2304 = vmatpush1.msra.mxu0 0.0
    %2305 = vmatprep.subr.mxu0 0.0
    %2306 = vmatpush1.msra.mxu0 0.0
    %2307 = vmatprep.subr.mxu0 0.0
    %2308 = vmatpush1.msra.mxu0 0.0
    %2309 = vmatprep.subr.mxu0 0.0
    %2310 = vmatpush1.msra.mxu0 0.0
    %2311 = vmatprep.subr.mxu0 0.0
    %2312 = vmatpush1.msra.mxu0 0.0
    %2313 = vmatprep.subr.mxu0 0.0
    %2314 = vmatpush1.msra.mxu0 0.0
    %2315 = vmatprep.mubr.f32.mxu0 0.0
    %2316 = vmatmul.mubr.f32.gmra.mrb[0].mxu0 %v2249
    %v2317 = vpop.f32.mrb[0].mxu0
    %v2318 = vadd.f32 %v1119, %v2317
    %v2319 = vpop.f32.mrb[0].mxu0
    %2320 = vdwg.mxu0
    %v2321 = vadd.f32 %v2318, %v2173
    %v2322 = vsel %vm165, %v2321, 0.0
    %v2323 = vrot.slane %v2322, 4
    %v2324 = vadd.f32 %v2322, %v2323
    %v2325 = vrot.slane %v2324, 2
    %v2326 = vadd.f32 %v2324, %v2325
    %v2327 = vrot.slane %v2326, 1
    %v2328 = vadd.f32 %v2326, %v2327
    %v2329 = vmul.f32 %v2328, %v1006
    %v2330 = vsub.f32 %v2321, %v2329
    %v2331 = vmul.f32 %v2330, %v2330
    %v2332 = vsel %vm165, %v2331, 0.0
    %v2333 = vrot.slane %v2332, 4
    %v2334 = vadd.f32 %v2332, %v2333
    %v2335 = vrot.slane %v2334, 2
    %v2336 = vadd.f32 %v2334, %v2335
    %v2337 = vrot.slane %v2336, 1
    %v2338 = vadd.f32 %v2336, %v2337
    %v2339 = vmul.f32 %v2338, %v1006
    %v2340 = vadd.f32 %v2339, 1e-05
    %v2341 = vrsqrt.pop %v2340
    %v2342 = vmul.f32 %v2330, %v2341
    %v2343 = vmul.f32 %v2342, %v1221
    %v2344 = vadd.f32 %v2343, %v1228
    %v2346 = vcombine.high %v2344, %v2344
    %v2348 = vunpack.c.l.s4 1966171168
    %v2349 = vunpack.c.0.s8 %v2348
    %v2350 = vlaneseq
    %v2351 = vshrl.u32 %v2350, 7
    %v2352 = vsub.s32 %v2349, %v2351
    %v2353 = vrot.slane %v2344, %v2352
    %v2355 = vunpack.c.l.s4 1966171168
    %v2356 = vunpack.c.0.s8 %v2355
    %v2357 = vlaneseq
    %v2358 = vshrl.u32 %v2357, 7
    %v2359 = vsub.s32 %v2356, %v2358
    %v2360 = vrot.slane %v2346, %v2359
    %v2361 = vcombine.high %v2353, %v2353
    %v2362 = vcombine.high %v2360, %v2360
    %v2364 = vunpack.c.l.s4 1966171168
    %v2365 = vunpack.c.0.s8 %v2364
    %v2366 = vlaneseq
    %v2367 = vshrl.u32 %v2366, 7
    %v2368 = vsub.s32 %v2365, %v2367
    %v2369 = vrot.slane %v2353, %v2368
    %v2371 = vunpack.c.l.s4 1966171168
    %v2372 = vunpack.c.0.s8 %v2371
    %v2373 = vlaneseq
    %v2374 = vshrl.u32 %v2373, 7
    %v2375 = vsub.s32 %v2372, %v2374
    %v2376 = vrot.slane %v2360, %v2375
    %v2378 = vunpack.c.l.s4 1966171168
    %v2379 = vunpack.c.0.s8 %v2378
    %v2380 = vlaneseq
    %v2381 = vshrl.u32 %v2380, 7
    %v2382 = vsub.s32 %v2379, %v2381
    %v2383 = vrot.slane %v2361, %v2382
    %v2385 = vunpack.c.l.s4 1966171168
    %v2386 = vunpack.c.0.s8 %v2385
    %v2387 = vlaneseq
    %v2388 = vshrl.u32 %v2387, 7
    %v2389 = vsub.s32 %v2386, %v2388
    %v2390 = vrot.slane %v2362, %v2389
    %v2391 = vcombine.high %v2369, %v2369
    %v2392 = vcombine.high %v2376, %v2376
    %v2393 = vcombine.high %v2383, %v2383
    %v2394 = vcombine.high %v2390, %v2390
    %2403 = vst.msk [vmem:[#allocation11 + $0x1] sm:$0x1] %vm1289, %v2369
    %2404 = vst.msk [vmem:[#allocation11 + $0x3] sm:$0x1] %vm1289, %v2383
    %2405 = vst.msk [vmem:[#allocation11 + $0x5] sm:$0x1] %vm1289, %v2391
    %2406 = vst.msk [vmem:[#allocation11 + $0x7] sm:$0x1] %vm1289, %v2393
    %2407 = vst.msk [vmem:[#allocation11 + $0x9] sm:$0x1] %vm1289, %v2376
    %2408 = vst.msk [vmem:[#allocation11 + $0xb] sm:$0x1] %vm1289, %v2390
    %2409 = vst.msk [vmem:[#allocation11 + $0xd] sm:$0x1] %vm1289, %v2392
    %2410 = vst.msk [vmem:[#allocation11 + $0xf] sm:$0x1] %vm1289, %v2394
    // Predicated region
    $region70: #{tpu_custom_call.1} parent=1 // pred_check
      _
    $region71: #{tpu_custom_call.1} parent=1 // pred_check_branch
      %2412 = sbr.rel (0) target = $region73
    $region72: #{tpu_custom_call.1} parent=1 // pred_region
      %s2414 = ssub.s32 256, 256
      %2415 = vsyncadd [#allocation5], %s2414
      %s2416 = sshll.u32 [#allocation11], 4
      %s2417 = int_to_ptr.vmem [resolvable:$true] %s2416
      %2422 = dma.vmem_to_hbm [thread:$0]  %s2417, 256, %s13, [#allocation5], 32, 32, 2
    $region73: #{tpu_custom_call.1} parent=1 // pred_fallthru
      _
    // Predicated region
    $region74: #{tpu_custom_call.1} parent=1 // pred_check
      _
    $region75: #{tpu_custom_call.1} parent=1 // pred_check_branch
      %2424 = sbr.rel (0) target = $region77
    $region76: #{tpu_custom_call.1} parent=1 // pred_region
      %2425 = dma.done [#allocation5], 256
    $region77: #{tpu_custom_call.1} parent=1 // pred_fallthru
      _
    %2426 = vsyncpa [#allocation4], 1
    %2427 = vsyncpa [#allocation7], 1
    %2428 = vsyncpa [#allocation10], 1
    %2429 = vsyncpa [#allocation5], 1

</llo_original>
